<compile_context>
chip_gen: v7x
topology: tpu7x:2x2x1
jax: 0.10.0
libtpu: 0.0.40
codegen_flags: <defaults>
</compile_context>

<pallas_src>
import functools
import math

import jax
import jax.numpy as jnp
from jax.experimental import pallas as pl
from jax.experimental.pallas import tpu as pltpu

_INV_SQRT2 = 1.0 / math.sqrt(2.0)
_SQRT_2_OVER_PI = math.sqrt(2.0 / math.pi)


def _round_up(v, m):
    return ((v + m - 1) // m) * m


def _has_bf16_vpu():
    """True on chips with bf16 VPU/EUP (v6e, v7x); False on v5e / unknown."""
    try:
        kind = jax.devices()[0].device_kind.lower()
    except Exception:  # pragma: no cover - defensive
        return False
    return ("v6" in kind) or ("v7" in kind) or ("7x" in kind)


def _gelu_exact_f32(z):
    # Exact (erf-based) GELU matching torch.nn.GELU(approximate='none').
    # erf via Abramowitz-Stegun 7.1.26 (|err| <= 1.5e-7); avoids relying on a
    # native erf lowering in Mosaic - only exp / divide / FMA / select used.
    u = z * _INV_SQRT2
    au = jnp.abs(u)
    t = 1.0 / (1.0 + 0.3275911 * au)
    poly = t * (0.254829592 + t * (-0.284496736 + t * (1.421413741
                + t * (-1.453152027 + t * 1.061405429))))
    erf_abs = 1.0 - poly * jnp.exp(-(au * au))
    erf_u = jnp.where(u < 0.0, -erf_abs, erf_abs)
    return 0.5 * z * (1.0 + erf_u)


def _gelu_tanh(z):
    # torch.nn.GELU(approximate='tanh'); tanh lands on the EUP slot.
    inner = _SQRT_2_OVER_PI * (z + 0.044715 * (z * z * z))
    return 0.5 * z * (1.0 + jnp.tanh(inner))


def _mlp_kernel(xin_ref, w_ref, s_ref, o_ref, *, tb2, bf16_elem, approx_gelu):
    f32 = jnp.float32
    bf16 = jnp.bfloat16

    # ---- small f32 params (layout defined in _pack_params) ----------------
    wc      = s_ref[0:1, 0:16]              # c_embed weight  (1, 16)
    w1x0    = s_ref[1:2, 0:16]              # layer-1 row for x[:, 0]
    w1x1    = s_ref[2:3, 0:16]              # layer-1 row for x[:, 1]
    w1s_sin = s_ref[3:4, 0:16]              # layer-1 row for sin embed
    w1s_cos = s_ref[4:5, 0:16]              # layer-1 row for cos embed
    bc      = s_ref[5:6, 0:16]
    b1      = s_ref[6:7, 0:16]
    b2      = s_ref[7:8, 0:128]
    b3      = s_ref[8:9, 0:256]
    b4      = s_ref[9:10, 0:128]
    b5      = s_ref[10:11, 0:16]
    b6      = s_ref[11:12, 0:128]           # only lanes 0:2 real, rest zero

    # ---- bf16 matmul weights from the packed slab (MXU operands) ----------
    # All sub-blocks start at 16-row / 128-lane aligned offsets.
    w3  = w_ref[0:128, 0:256]                # Linear(128, 256)
    w4  = w_ref[0:256, 256:384]              # Linear(256, 128)
    w2  = w_ref[128:144, 0:128]              # Linear(16, 128)
    w5  = w_ref[128:256, 128:144]            # Linear(128, 16)
    w1c = w_ref[144:160, 0:16]               # layer-1 block for c_embeds
    w6  = w_ref[160:176, 0:128]              # Linear(16, 2) zero-padded to 128

    def act(acc_f32, b_row):
        # bias add in f32, then GELU in the elementwise dtype; result feeds
        # straight into the next MXU dot as bf16 (no standalone cast pass).
        z = acc_f32 + b_row
        if bf16_elem:
            z = z.astype(bf16)
        g = _gelu_tanh(z) if approx_gelu else _gelu_exact_f32(z)
        return g.astype(bf16)

    def half(xin):
        x0 = xin[:, 0:1]
        x1 = xin[:, 1:2]
        sig = xin[:, 2:3]
        c = xin[:, 3:4]
        mask = xin[:, 4:5]

        # get_sigma_embeds: [sin(log(sigma)/2), cos(log(sigma)/2)]  (EUP work)
        half_log = 0.5 * jnp.log(sig)
        sin_e = jnp.sin(half_log)
        cos_e = jnp.cos(half_log)

        # conditional embedding: Linear(1, 16) as broadcast FMA + context mask
        c_emb = (c * wc + bc) * mask                      # (tb2, 16) f32

        # Layer 1: concat([x, sigma_embeds, c_embeds]) @ W1 + b1, decomposed
        # into VPU broadcast FMAs (K<=2 pieces) + one small MXU matmul.
        h1 = (x0 * w1x0 + x1 * w1x1
              + sin_e * w1s_sin + cos_e * w1s_cos
              + jnp.dot(c_emb.astype(bf16), w1c, preferred_element_type=f32))
        h = act(h1, b1)
        h = act(jnp.dot(h, w2, preferred_element_type=f32), b2)
        h = act(jnp.dot(h, w3, preferred_element_type=f32), b3)
        h = act(jnp.dot(h, w4, preferred_element_type=f32), b4)
        h = act(jnp.dot(h, w5, preferred_element_type=f32), b5)
        # Final Linear(16, 2), zero-padded to 128 lanes -> lane-dense output.
        return jnp.dot(h, w6, preferred_element_type=f32) + b6   # (tb2, 128)

    # Two independent sub-tiles: the LLO scheduler interleaves half-A's MXU
    # matmuls with half-B's VPU/EUP GELU work (and vice versa).
    o_ref[0:tb2, :] = half(xin_ref[0:tb2, :]).astype(o_ref.dtype)
    o_ref[tb2:2 * tb2, :] = half(xin_ref[tb2:2 * tb2, :]).astype(o_ref.dtype)


def init_params(key, dim=2, cond_dim=1, cond_hid_dim=16,
                hidden_dims=(16, 128, 256, 128, 16)):
    """Deterministic init mimicking PyTorch Linear default (uniform +-1/sqrt(fan_in))."""
    def linear(k, fan_in, fan_out):
        kw, kb = jax.random.split(k)
        bound = 1.0 / math.sqrt(fan_in)
        w_t = jax.random.uniform(kw, (fan_in, fan_out), jnp.float32, -bound, bound)
        b = jax.random.uniform(kb, (1, fan_out), jnp.float32, -bound, bound)
        return w_t, b

    net_dims = (dim + 2 + cond_hid_dim,) + tuple(hidden_dims) + (dim,)
    keys = jax.random.split(key, len(net_dims))
    params = {}
    params["wc_t"], params["bc"] = linear(keys[0], cond_dim, cond_hid_dim)
    ws, bs = [], []
    for i, (din, dout) in enumerate(zip(net_dims[:-1], net_dims[1:])):
        w_t, b = linear(keys[i + 1], din, dout)
        ws.append(w_t)
        bs.append(b)
    params["net_w"] = ws
    params["net_b"] = bs
    return params


def _pack_params(params, dim=2, cond_hid_dim=16):
    """Pack all weights/biases into one bf16 slab + one small f32 array."""
    w1_t = params["net_w"][0]                # (dim + 2 + cond_hid, 16)
    w1x = w1_t[0:dim]                        # (2, 16)
    w1s = w1_t[dim:dim + 2]                  # (2, 16): row0 -> sin, row1 -> cos
    w1c = w1_t[dim + 2:]                     # (16, 16)
    w2, w3, w4, w5, w6 = params["net_w"][1:6]
    b1, b2, b3, b4, b5, b6 = params["net_b"][0:6]

    bf16 = jnp.bfloat16
    slab = jnp.zeros((256, 384), bf16)
    slab = slab.at[0:128, 0:256].set(w3.astype(bf16))
    slab = slab.at[0:256, 256:384].set(w4.astype(bf16))
    slab = slab.at[128:144, 0:128].set(w2.astype(bf16))
    slab = slab.at[128:256, 128:144].set(w5.astype(bf16))
    slab = slab.at[144:160, 0:16].set(w1c.astype(bf16))
    slab = slab.at[160:176, 0:2].set(w6.astype(bf16))        # padded to 128 lanes

    small = jnp.zeros((16, 256), jnp.float32)
    small = small.at[0, 0:16].set(params["wc_t"].reshape(cond_hid_dim))
    small = small.at[1, 0:16].set(w1x[0])
    small = small.at[2, 0:16].set(w1x[1])
    small = small.at[3, 0:16].set(w1s[0])
    small = small.at[4, 0:16].set(w1s[1])
    small = small.at[5, 0:16].set(params["bc"].reshape(cond_hid_dim))
    small = small.at[6, 0:16].set(b1.reshape(-1))
    small = small.at[7, 0:128].set(b2.reshape(-1))
    small = small.at[8, 0:256].set(b3.reshape(-1))
    small = small.at[9, 0:128].set(b4.reshape(-1))
    small = small.at[10, 0:16].set(b5.reshape(-1))
    small = small.at[11, 0:2].set(b6.reshape(-1))
    return slab, small


def forward(params, x, sigma, c, context_mask, *, dim=2, cond_dim=1,
            cond_hid_dim=16, hidden_dims=(16, 128, 256, 128, 16),
            tb_max=1024, fast_elementwise=None):
    assert (dim == 2 and cond_dim == 1 and cond_hid_dim == 16
            and tuple(hidden_dims) == (16, 128, 256, 128, 16)), \
        "kernel packing is specialized to the module defaults"
    B = x.shape[0]

    if fast_elementwise is None:
        # bf16 bias+GELU (tanh approx) on v6e/v7x; exact-erf f32 on v5e/other.
        fast_elementwise = _has_bf16_vpu()

    # sigma.squeeze(); scalar sigma is repeated over the batch.
    # NOTE: log(sigma) requires sigma > 0 (same implicit contract as PyTorch).
    sigma = jnp.squeeze(jnp.asarray(sigma, jnp.float32))
    if sigma.ndim == 0:
        sigma = jnp.broadcast_to(sigma, (B,))
    else:
        assert sigma.shape == (B,), "sigma.shape == [] or [batches]!"

    # Batch tiling: big tiles to amortize the ~0.35us per-grid-step overhead,
    # but always >= 2 grid steps when B > 16 so ("parallel",) can use both
    # TensorCores on v7x.  TB is a multiple of 16 so the in-kernel half split
    # stays sublane-aligned.  Tail rows padded with sigma=1 (log finite).
    tb_max = max(16, _round_up(int(tb_max), 16))
    n_tiles = max(1, -(-B // tb_max))
    if n_tiles == 1 and B > 16:
        n_tiles = 2
    TB = max(16, _round_up(-(-B // n_tiles), 16))
    Bp = TB * n_tiles

    xin = jnp.zeros((Bp, 8), jnp.float32)
    xin = xin.at[:, 2].set(1.0)
    xin = xin.at[:B, 0:2].set(x.astype(jnp.float32))
    xin = xin.at[:B, 2].set(sigma)
    xin = xin.at[:B, 3].set(c.astype(jnp.float32).reshape(B))
    xin = xin.at[:B, 4].set(context_mask.astype(jnp.float32).reshape(B))

    slab, small = _pack_params(params, dim=dim, cond_hid_dim=cond_hid_dim)

    # Per padded row: ~70K MACs, ~550 transcendentals (log/sin/cos + GELU).
    cost = pl.CostEstimate(
        flops=int(2 * 70000 * Bp),
        transcendentals=int(550 * Bp),
        bytes_accessed=int(32 * Bp + 128 * 4 * Bp + slab.size * 2 + small.size * 4),
    )

    kernel = functools.partial(
        _mlp_kernel, tb2=TB // 2,
        bf16_elem=bool(fast_elementwise), approx_gelu=bool(fast_elementwise))

    out = pl.pallas_call(
        kernel,
        out_shape=jax.ShapeDtypeStruct((Bp, 128), jnp.float32),   # lane-dense
        grid=(n_tiles,),
        in_specs=[
            pl.BlockSpec((TB, 8), lambda i: (i, 0)),
            pl.BlockSpec((256, 384), lambda i: (0, 0)),   # weight slab, resident
            pl.BlockSpec((16, 256), lambda i: (0, 0)),    # small params, resident
        ],
        out_specs=pl.BlockSpec((TB, 128), lambda i: (i, 0)),
        compiler_params=pltpu.CompilerParams(
            dimension_semantics=("parallel",),
            vmem_limit_bytes=32 * 1024 * 1024),
        cost_estimate=cost,
    )(xin, slab, small)
    return out[:B, :dim]


def forward_ref(params, x, sigma, c, context_mask):
    """Pure-JAX f32 reference of the PyTorch module forward (exact GELU)."""
    B = x.shape[0]
    sigma = jnp.squeeze(jnp.asarray(sigma, jnp.float32))
    if sigma.ndim == 0:
        sigma = jnp.broadcast_to(sigma, (B,))
    sig = sigma.reshape(B, 1)
    sigma_embeds = jnp.concatenate(
        [jnp.sin(jnp.log(sig) / 2), jnp.cos(jnp.log(sig) / 2)], axis=1)
    c_emb = c.astype(jnp.float32) @ params["wc_t"] + params["bc"]
    c_emb = c_emb * context_mask.astype(jnp.float32)
    h = jnp.concatenate([x.astype(jnp.float32), sigma_embeds, c_emb], axis=1)
    n = len(params["net_w"])
    for i, (w, b) in enumerate(zip(params["net_w"], params["net_b"])):
        h = h @ w + b
        if i < n - 1:
            h = jax.nn.gelu(h, approximate=False)
    return h


if __name__ == "__main__":
    key = jax.random.PRNGKey(0)
    kx, ks, kc, km, kp = jax.random.split(key, 5)

    B, dim = 8, 2
    x = jax.random.normal(kx, (B, dim), jnp.float32)
    sigma = jnp.exp(jax.random.normal(ks, (B,), jnp.float32))          # positive sigmas
    c = jax.random.normal(kc, (B, 1), jnp.float32)                     # cond_dim = 1
    context_mask = (jax.random.uniform(km, (B, 1)) > 0.5).astype(jnp.float32)

    params = init_params(kp, dim=dim)

    out = jax.block_until_ready(forward(params, x, sigma, c, context_mask, dim=dim))
    assert out.shape == (B, dim) and out.dtype == jnp.float32
    assert bool(jnp.all(jnp.isfinite(out)))

    # Loose check vs pure-JAX f32 reference (bf16 matmul weights in-kernel,
    # bf16/tanh GELU on v6e/v7x).
    ref = forward_ref(params, x, sigma, c, context_mask)
    err = float(jnp.max(jnp.abs(out - ref)))
    tol = 2e-2 + 6e-2 * float(jnp.max(jnp.abs(ref)))
    assert err < tol, f"mismatch vs reference: max_abs_err={err} tol={tol}"

    print("KERNEL_OK")
</pallas_src>

<mosaic_0001>
module attributes {stable_mosaic.version = 11 : i64} {
  func.func @_mlp_kernel(%arg0: i32, %arg1: memref<16x8xf32, #tpu.memory_space<vmem>>, %arg2: memref<256x384xbf16, #tpu.memory_space<vmem>>, %arg3: memref<16x256xf32, #tpu.memory_space<vmem>>, %arg4: memref<16x128xf32, #tpu.memory_space<vmem>>) attributes {dimension_semantics = [#tpu.dimension_semantics<parallel>], iteration_bounds = array<i64: 1>, scalar_prefetch = 0 : i64, scratch_operands = 0 : i64, tpu.core_type = #tpu.core_type<tc>, window_params = [{transform_indices = @transform_0, window_bounds = array<i64: 16, 8>}, {pipeline_mode = #tpu.pipeline_mode<synchronous>, transform_indices = @transform_1, window_bounds = array<i64: 256, 384>}, {pipeline_mode = #tpu.pipeline_mode<synchronous>, transform_indices = @transform_2, window_bounds = array<i64: 16, 256>}, {transform_indices = @transform_3, window_bounds = array<i64: 16, 128>}]} {
    %c0 = arith.constant 0 : index
    %c0_0 = arith.constant 0 : index
    %0 = vector.load %arg3[%c0, %c0_0] : memref<16x256xf32, #tpu.memory_space<vmem>>, vector<1x16xf32>
    %c1 = arith.constant 1 : index
    %c0_1 = arith.constant 0 : index
    %1 = vector.load %arg3[%c1, %c0_1] : memref<16x256xf32, #tpu.memory_space<vmem>>, vector<1x16xf32>
    %c2 = arith.constant 2 : index
    %c0_2 = arith.constant 0 : index
    %2 = vector.load %arg3[%c2, %c0_2] : memref<16x256xf32, #tpu.memory_space<vmem>>, vector<1x16xf32>
    %c3 = arith.constant 3 : index
    %c0_3 = arith.constant 0 : index
    %3 = vector.load %arg3[%c3, %c0_3] : memref<16x256xf32, #tpu.memory_space<vmem>>, vector<1x16xf32>
    %c4 = arith.constant 4 : index
    %c0_4 = arith.constant 0 : index
    %4 = vector.load %arg3[%c4, %c0_4] : memref<16x256xf32, #tpu.memory_space<vmem>>, vector<1x16xf32>
    %c5 = arith.constant 5 : index
    %c0_5 = arith.constant 0 : index
    %5 = vector.load %arg3[%c5, %c0_5] : memref<16x256xf32, #tpu.memory_space<vmem>>, vector<1x16xf32>
    %c6 = arith.constant 6 : index
    %c0_6 = arith.constant 0 : index
    %6 = vector.load %arg3[%c6, %c0_6] : memref<16x256xf32, #tpu.memory_space<vmem>>, vector<1x16xf32>
    %c7 = arith.constant 7 : index
    %c0_7 = arith.constant 0 : index
    %7 = vector.load %arg3[%c7, %c0_7] : memref<16x256xf32, #tpu.memory_space<vmem>>, vector<1x128xf32>
    %c8 = arith.constant 8 : index
    %c0_8 = arith.constant 0 : index
    %8 = vector.load %arg3[%c8, %c0_8] : memref<16x256xf32, #tpu.memory_space<vmem>>, vector<1x256xf32>
    %c9 = arith.constant 9 : index
    %c0_9 = arith.constant 0 : index
    %9 = vector.load %arg3[%c9, %c0_9] : memref<16x256xf32, #tpu.memory_space<vmem>>, vector<1x128xf32>
    %c10 = arith.constant 10 : index
    %c0_10 = arith.constant 0 : index
    %10 = vector.load %arg3[%c10, %c0_10] : memref<16x256xf32, #tpu.memory_space<vmem>>, vector<1x16xf32>
    %c11 = arith.constant 11 : index
    %c0_11 = arith.constant 0 : index
    %11 = vector.load %arg3[%c11, %c0_11] : memref<16x256xf32, #tpu.memory_space<vmem>>, vector<1x128xf32>
    %c0_12 = arith.constant 0 : index
    %c0_13 = arith.constant 0 : index
    %12 = vector.load %arg2[%c0_12, %c0_13] : memref<256x384xbf16, #tpu.memory_space<vmem>>, vector<128x256xbf16>
    %c0_14 = arith.constant 0 : index
    %c256 = arith.constant 256 : index
    %13 = vector.load %arg2[%c0_14, %c256] : memref<256x384xbf16, #tpu.memory_space<vmem>>, vector<256x128xbf16>
    %c128 = arith.constant 128 : index
    %c0_15 = arith.constant 0 : index
    %14 = vector.load %arg2[%c128, %c0_15] : memref<256x384xbf16, #tpu.memory_space<vmem>>, vector<16x128xbf16>
    %c128_16 = arith.constant 128 : index
    %c128_17 = arith.constant 128 : index
    %15 = vector.load %arg2[%c128_16, %c128_17] : memref<256x384xbf16, #tpu.memory_space<vmem>>, vector<128x16xbf16>
    %c144 = arith.constant 144 : index
    %c0_18 = arith.constant 0 : index
    %16 = vector.load %arg2[%c144, %c0_18] : memref<256x384xbf16, #tpu.memory_space<vmem>>, vector<16x16xbf16>
    %c160 = arith.constant 160 : index
    %c0_19 = arith.constant 0 : index
    %17 = vector.load %arg2[%c160, %c0_19] : memref<256x384xbf16, #tpu.memory_space<vmem>>, vector<16x128xbf16>
    %c0_20 = arith.constant 0 : index
    %c0_21 = arith.constant 0 : index
    %18 = vector.load %arg1[%c0_20, %c0_21] : memref<16x8xf32, #tpu.memory_space<vmem>>, vector<8x8xf32>
    %19 = vector.extract_strided_slice %18 {offsets = [0, 0], sizes = [8, 1], strides = [1, 1]} : vector<8x8xf32> to vector<8x1xf32>
    %20 = vector.extract_strided_slice %18 {offsets = [0, 1], sizes = [8, 1], strides = [1, 1]} : vector<8x8xf32> to vector<8x1xf32>
    %21 = vector.extract_strided_slice %18 {offsets = [0, 2], sizes = [8, 1], strides = [1, 1]} : vector<8x8xf32> to vector<8x1xf32>
    %22 = vector.extract_strided_slice %18 {offsets = [0, 3], sizes = [8, 1], strides = [1, 1]} : vector<8x8xf32> to vector<8x1xf32>
    %23 = vector.extract_strided_slice %18 {offsets = [0, 4], sizes = [8, 1], strides = [1, 1]} : vector<8x8xf32> to vector<8x1xf32>
    %24 = math.log %21 : vector<8x1xf32>
    %cst = arith.constant 5.000000e-01 : f32
    %25 = vector.broadcast %cst : f32 to vector<8x1xf32>
    %26 = arith.mulf %25, %24 : vector<8x1xf32>
    %27 = math.sin %26 : vector<8x1xf32>
    %28 = math.cos %26 : vector<8x1xf32>
    %29 = vector.broadcast %22 : vector<8x1xf32> to vector<8x16xf32>
    %30 = vector.broadcast %0 : vector<1x16xf32> to vector<8x16xf32>
    %31 = arith.mulf %29, %30 : vector<8x16xf32>
    %32 = vector.broadcast %5 : vector<1x16xf32> to vector<8x16xf32>
    %33 = arith.addf %31, %32 : vector<8x16xf32>
    %34 = vector.broadcast %23 : vector<8x1xf32> to vector<8x16xf32>
    %35 = arith.mulf %33, %34 : vector<8x16xf32>
    %36 = vector.broadcast %19 : vector<8x1xf32> to vector<8x16xf32>
    %37 = vector.broadcast %1 : vector<1x16xf32> to vector<8x16xf32>
    %38 = arith.mulf %36, %37 : vector<8x16xf32>
    %39 = vector.broadcast %20 : vector<8x1xf32> to vector<8x16xf32>
    %40 = vector.broadcast %2 : vector<1x16xf32> to vector<8x16xf32>
    %41 = arith.mulf %39, %40 : vector<8x16xf32>
    %42 = arith.addf %38, %41 : vector<8x16xf32>
    %43 = vector.broadcast %27 : vector<8x1xf32> to vector<8x16xf32>
    %44 = vector.broadcast %3 : vector<1x16xf32> to vector<8x16xf32>
    %45 = arith.mulf %43, %44 : vector<8x16xf32>
    %46 = arith.addf %42, %45 : vector<8x16xf32>
    %47 = vector.broadcast %28 : vector<8x1xf32> to vector<8x16xf32>
    %48 = vector.broadcast %4 : vector<1x16xf32> to vector<8x16xf32>
    %49 = arith.mulf %47, %48 : vector<8x16xf32>
    %50 = arith.addf %46, %49 : vector<8x16xf32>
    %51 = arith.truncf %35 : vector<8x16xf32> to vector<8x16xbf16>
    %cst_22 = arith.constant dense<0.000000e+00> : vector<8x16xf32>
    %52 = tpu.matmul %51, %16, %cst_22 {dimension_numbers = #tpu.dot_dimension_numbers<[1], [0], [0], [1], [0, 0, 1, 1], [], []>} : vector<8x16xbf16>, vector<16x16xbf16>, vector<8x16xf32> -> vector<8x16xf32>
    %53 = arith.addf %50, %52 : vector<8x16xf32>
    %54 = vector.broadcast %6 : vector<1x16xf32> to vector<8x16xf32>
    %55 = arith.addf %53, %54 : vector<8x16xf32>
    %cst_23 = arith.constant 0.707106769 : f32
    %56 = vector.broadcast %cst_23 : f32 to vector<8x16xf32>
    %57 = arith.mulf %55, %56 : vector<8x16xf32>
    %58 = math.absf %57 : vector<8x16xf32>
    %cst_24 = arith.constant 0.327591091 : f32
    %59 = vector.broadcast %cst_24 : f32 to vector<8x16xf32>
    %60 = arith.mulf %59, %58 : vector<8x16xf32>
    %cst_25 = arith.constant 1.000000e+00 : f32
    %61 = vector.broadcast %cst_25 : f32 to vector<8x16xf32>
    %62 = arith.addf %61, %60 : vector<8x16xf32>
    %cst_26 = arith.constant 1.000000e+00 : f32
    %63 = vector.broadcast %cst_26 : f32 to vector<8x16xf32>
    %64 = arith.divf %63, %62 : vector<8x16xf32>
    %cst_27 = arith.constant 1.06140542 : f32
    %65 = vector.broadcast %cst_27 : f32 to vector<8x16xf32>
    %66 = arith.mulf %64, %65 : vector<8x16xf32>
    %cst_28 = arith.constant -1.45315206 : f32
    %67 = vector.broadcast %cst_28 : f32 to vector<8x16xf32>
    %68 = arith.addf %67, %66 : vector<8x16xf32>
    %69 = arith.mulf %64, %68 : vector<8x16xf32>
    %cst_29 = arith.constant 1.42141378 : f32
    %70 = vector.broadcast %cst_29 : f32 to vector<8x16xf32>
    %71 = arith.addf %70, %69 : vector<8x16xf32>
    %72 = arith.mulf %64, %71 : vector<8x16xf32>
    %cst_30 = arith.constant -0.284496725 : f32
    %73 = vector.broadcast %cst_30 : f32 to vector<8x16xf32>
    %74 = arith.addf %73, %72 : vector<8x16xf32>
    %75 = arith.mulf %64, %74 : vector<8x16xf32>
    %cst_31 = arith.constant 0.254829586 : f32
    %76 = vector.broadcast %cst_31 : f32 to vector<8x16xf32>
    %77 = arith.addf %76, %75 : vector<8x16xf32>
    %78 = arith.mulf %64, %77 : vector<8x16xf32>
    %79 = arith.mulf %58, %58 : vector<8x16xf32>
    %cst_32 = arith.constant 0.000000e+00 : f32
    %80 = vector.broadcast %cst_32 : f32 to vector<8x16xf32>
    %81 = arith.subf %80, %79 : vector<8x16xf32>
    %82 = math.exp %81 : vector<8x16xf32>
    %83 = arith.mulf %78, %82 : vector<8x16xf32>
    %cst_33 = arith.constant 1.000000e+00 : f32
    %84 = vector.broadcast %cst_33 : f32 to vector<8x16xf32>
    %85 = arith.subf %84, %83 : vector<8x16xf32>
    %cst_34 = arith.constant 0.000000e+00 : f32
    %86 = vector.broadcast %cst_34 : f32 to vector<8x16xf32>
    %87 = arith.cmpf olt, %57, %86 : vector<8x16xf32>
    %cst_35 = arith.constant 0.000000e+00 : f32
    %88 = vector.broadcast %cst_35 : f32 to vector<8x16xf32>
    %89 = arith.subf %88, %85 : vector<8x16xf32>
    %90 = arith.select %87, %89, %85 : vector<8x16xi1>, vector<8x16xf32>
    %cst_36 = arith.constant 5.000000e-01 : f32
    %91 = vector.broadcast %cst_36 : f32 to vector<8x16xf32>
    %92 = arith.mulf %91, %55 : vector<8x16xf32>
    %cst_37 = arith.constant 1.000000e+00 : f32
    %93 = vector.broadcast %cst_37 : f32 to vector<8x16xf32>
    %94 = arith.addf %93, %90 : vector<8x16xf32>
    %95 = arith.mulf %92, %94 : vector<8x16xf32>
    %96 = arith.truncf %95 : vector<8x16xf32> to vector<8x16xbf16>
    %cst_38 = arith.constant dense<0.000000e+00> : vector<8x128xf32>
    %97 = tpu.matmul %96, %14, %cst_38 {dimension_numbers = #tpu.dot_dimension_numbers<[1], [0], [0], [1], [0, 0, 1, 1], [], []>} : vector<8x16xbf16>, vector<16x128xbf16>, vector<8x128xf32> -> vector<8x128xf32>
    %98 = vector.broadcast %7 : vector<1x128xf32> to vector<8x128xf32>
    %99 = arith.addf %97, %98 : vector<8x128xf32>
    %cst_39 = arith.constant 0.707106769 : f32
    %100 = vector.broadcast %cst_39 : f32 to vector<8x128xf32>
    %101 = arith.mulf %99, %100 : vector<8x128xf32>
    %102 = math.absf %101 : vector<8x128xf32>
    %cst_40 = arith.constant 0.327591091 : f32
    %103 = vector.broadcast %cst_40 : f32 to vector<8x128xf32>
    %104 = arith.mulf %103, %102 : vector<8x128xf32>
    %cst_41 = arith.constant 1.000000e+00 : f32
    %105 = vector.broadcast %cst_41 : f32 to vector<8x128xf32>
    %106 = arith.addf %105, %104 : vector<8x128xf32>
    %cst_42 = arith.constant 1.000000e+00 : f32
    %107 = vector.broadcast %cst_42 : f32 to vector<8x128xf32>
    %108 = arith.divf %107, %106 : vector<8x128xf32>
    %cst_43 = arith.constant 1.06140542 : f32
    %109 = vector.broadcast %cst_43 : f32 to vector<8x128xf32>
    %110 = arith.mulf %108, %109 : vector<8x128xf32>
    %cst_44 = arith.constant -1.45315206 : f32
    %111 = vector.broadcast %cst_44 : f32 to vector<8x128xf32>
    %112 = arith.addf %111, %110 : vector<8x128xf32>
    %113 = arith.mulf %108, %112 : vector<8x128xf32>
    %cst_45 = arith.constant 1.42141378 : f32
    %114 = vector.broadcast %cst_45 : f32 to vector<8x128xf32>
    %115 = arith.addf %114, %113 : vector<8x128xf32>
    %116 = arith.mulf %108, %115 : vector<8x128xf32>
    %cst_46 = arith.constant -0.284496725 : f32
    %117 = vector.broadcast %cst_46 : f32 to vector<8x128xf32>
    %118 = arith.addf %117, %116 : vector<8x128xf32>
    %119 = arith.mulf %108, %118 : vector<8x128xf32>
    %cst_47 = arith.constant 0.254829586 : f32
    %120 = vector.broadcast %cst_47 : f32 to vector<8x128xf32>
    %121 = arith.addf %120, %119 : vector<8x128xf32>
    %122 = arith.mulf %108, %121 : vector<8x128xf32>
    %123 = arith.mulf %102, %102 : vector<8x128xf32>
    %cst_48 = arith.constant 0.000000e+00 : f32
    %124 = vector.broadcast %cst_48 : f32 to vector<8x128xf32>
    %125 = arith.subf %124, %123 : vector<8x128xf32>
    %126 = math.exp %125 : vector<8x128xf32>
    %127 = arith.mulf %122, %126 : vector<8x128xf32>
    %cst_49 = arith.constant 1.000000e+00 : f32
    %128 = vector.broadcast %cst_49 : f32 to vector<8x128xf32>
    %129 = arith.subf %128, %127 : vector<8x128xf32>
    %cst_50 = arith.constant 0.000000e+00 : f32
    %130 = vector.broadcast %cst_50 : f32 to vector<8x128xf32>
    %131 = arith.cmpf olt, %101, %130 : vector<8x128xf32>
    %cst_51 = arith.constant 0.000000e+00 : f32
    %132 = vector.broadcast %cst_51 : f32 to vector<8x128xf32>
    %133 = arith.subf %132, %129 : vector<8x128xf32>
    %134 = arith.select %131, %133, %129 : vector<8x128xi1>, vector<8x128xf32>
    %cst_52 = arith.constant 5.000000e-01 : f32
    %135 = vector.broadcast %cst_52 : f32 to vector<8x128xf32>
    %136 = arith.mulf %135, %99 : vector<8x128xf32>
    %cst_53 = arith.constant 1.000000e+00 : f32
    %137 = vector.broadcast %cst_53 : f32 to vector<8x128xf32>
    %138 = arith.addf %137, %134 : vector<8x128xf32>
    %139 = arith.mulf %136, %138 : vector<8x128xf32>
    %140 = arith.truncf %139 : vector<8x128xf32> to vector<8x128xbf16>
    %cst_54 = arith.constant dense<0.000000e+00> : vector<8x256xf32>
    %141 = tpu.matmul %140, %12, %cst_54 {dimension_numbers = #tpu.dot_dimension_numbers<[1], [0], [0], [1], [0, 0, 1, 1], [], []>} : vector<8x128xbf16>, vector<128x256xbf16>, vector<8x256xf32> -> vector<8x256xf32>
    %142 = vector.broadcast %8 : vector<1x256xf32> to vector<8x256xf32>
    %143 = arith.addf %141, %142 : vector<8x256xf32>
    %cst_55 = arith.constant 0.707106769 : f32
    %144 = vector.broadcast %cst_55 : f32 to vector<8x256xf32>
    %145 = arith.mulf %143, %144 : vector<8x256xf32>
    %146 = math.absf %145 : vector<8x256xf32>
    %cst_56 = arith.constant 0.327591091 : f32
    %147 = vector.broadcast %cst_56 : f32 to vector<8x256xf32>
    %148 = arith.mulf %147, %146 : vector<8x256xf32>
    %cst_57 = arith.constant 1.000000e+00 : f32
    %149 = vector.broadcast %cst_57 : f32 to vector<8x256xf32>
    %150 = arith.addf %149, %148 : vector<8x256xf32>
    %cst_58 = arith.constant 1.000000e+00 : f32
    %151 = vector.broadcast %cst_58 : f32 to vector<8x256xf32>
    %152 = arith.divf %151, %150 : vector<8x256xf32>
    %cst_59 = arith.constant 1.06140542 : f32
    %153 = vector.broadcast %cst_59 : f32 to vector<8x256xf32>
    %154 = arith.mulf %152, %153 : vector<8x256xf32>
    %cst_60 = arith.constant -1.45315206 : f32
    %155 = vector.broadcast %cst_60 : f32 to vector<8x256xf32>
    %156 = arith.addf %155, %154 : vector<8x256xf32>
    %157 = arith.mulf %152, %156 : vector<8x256xf32>
    %cst_61 = arith.constant 1.42141378 : f32
    %158 = vector.broadcast %cst_61 : f32 to vector<8x256xf32>
    %159 = arith.addf %158, %157 : vector<8x256xf32>
    %160 = arith.mulf %152, %159 : vector<8x256xf32>
    %cst_62 = arith.constant -0.284496725 : f32
    %161 = vector.broadcast %cst_62 : f32 to vector<8x256xf32>
    %162 = arith.addf %161, %160 : vector<8x256xf32>
    %163 = arith.mulf %152, %162 : vector<8x256xf32>
    %cst_63 = arith.constant 0.254829586 : f32
    %164 = vector.broadcast %cst_63 : f32 to vector<8x256xf32>
    %165 = arith.addf %164, %163 : vector<8x256xf32>
    %166 = arith.mulf %152, %165 : vector<8x256xf32>
    %167 = arith.mulf %146, %146 : vector<8x256xf32>
    %cst_64 = arith.constant 0.000000e+00 : f32
    %168 = vector.broadcast %cst_64 : f32 to vector<8x256xf32>
    %169 = arith.subf %168, %167 : vector<8x256xf32>
    %170 = math.exp %169 : vector<8x256xf32>
    %171 = arith.mulf %166, %170 : vector<8x256xf32>
    %cst_65 = arith.constant 1.000000e+00 : f32
    %172 = vector.broadcast %cst_65 : f32 to vector<8x256xf32>
    %173 = arith.subf %172, %171 : vector<8x256xf32>
    %cst_66 = arith.constant 0.000000e+00 : f32
    %174 = vector.broadcast %cst_66 : f32 to vector<8x256xf32>
    %175 = arith.cmpf olt, %145, %174 : vector<8x256xf32>
    %cst_67 = arith.constant 0.000000e+00 : f32
    %176 = vector.broadcast %cst_67 : f32 to vector<8x256xf32>
    %177 = arith.subf %176, %173 : vector<8x256xf32>
    %178 = arith.select %175, %177, %173 : vector<8x256xi1>, vector<8x256xf32>
    %cst_68 = arith.constant 5.000000e-01 : f32
    %179 = vector.broadcast %cst_68 : f32 to vector<8x256xf32>
    %180 = arith.mulf %179, %143 : vector<8x256xf32>
    %cst_69 = arith.constant 1.000000e+00 : f32
    %181 = vector.broadcast %cst_69 : f32 to vector<8x256xf32>
    %182 = arith.addf %181, %178 : vector<8x256xf32>
    %183 = arith.mulf %180, %182 : vector<8x256xf32>
    %184 = arith.truncf %183 : vector<8x256xf32> to vector<8x256xbf16>
    %cst_70 = arith.constant dense<0.000000e+00> : vector<8x128xf32>
    %185 = tpu.matmul %184, %13, %cst_70 {dimension_numbers = #tpu.dot_dimension_numbers<[1], [0], [0], [1], [0, 0, 1, 1], [], []>} : vector<8x256xbf16>, vector<256x128xbf16>, vector<8x128xf32> -> vector<8x128xf32>
    %186 = vector.broadcast %9 : vector<1x128xf32> to vector<8x128xf32>
    %187 = arith.addf %185, %186 : vector<8x128xf32>
    %cst_71 = arith.constant 0.707106769 : f32
    %188 = vector.broadcast %cst_71 : f32 to vector<8x128xf32>
    %189 = arith.mulf %187, %188 : vector<8x128xf32>
    %190 = math.absf %189 : vector<8x128xf32>
    %cst_72 = arith.constant 0.327591091 : f32
    %191 = vector.broadcast %cst_72 : f32 to vector<8x128xf32>
    %192 = arith.mulf %191, %190 : vector<8x128xf32>
    %cst_73 = arith.constant 1.000000e+00 : f32
    %193 = vector.broadcast %cst_73 : f32 to vector<8x128xf32>
    %194 = arith.addf %193, %192 : vector<8x128xf32>
    %cst_74 = arith.constant 1.000000e+00 : f32
    %195 = vector.broadcast %cst_74 : f32 to vector<8x128xf32>
    %196 = arith.divf %195, %194 : vector<8x128xf32>
    %cst_75 = arith.constant 1.06140542 : f32
    %197 = vector.broadcast %cst_75 : f32 to vector<8x128xf32>
    %198 = arith.mulf %196, %197 : vector<8x128xf32>
    %cst_76 = arith.constant -1.45315206 : f32
    %199 = vector.broadcast %cst_76 : f32 to vector<8x128xf32>
    %200 = arith.addf %199, %198 : vector<8x128xf32>
    %201 = arith.mulf %196, %200 : vector<8x128xf32>
    %cst_77 = arith.constant 1.42141378 : f32
    %202 = vector.broadcast %cst_77 : f32 to vector<8x128xf32>
    %203 = arith.addf %202, %201 : vector<8x128xf32>
    %204 = arith.mulf %196, %203 : vector<8x128xf32>
    %cst_78 = arith.constant -0.284496725 : f32
    %205 = vector.broadcast %cst_78 : f32 to vector<8x128xf32>
    %206 = arith.addf %205, %204 : vector<8x128xf32>
    %207 = arith.mulf %196, %206 : vector<8x128xf32>
    %cst_79 = arith.constant 0.254829586 : f32
    %208 = vector.broadcast %cst_79 : f32 to vector<8x128xf32>
    %209 = arith.addf %208, %207 : vector<8x128xf32>
    %210 = arith.mulf %196, %209 : vector<8x128xf32>
    %211 = arith.mulf %190, %190 : vector<8x128xf32>
    %cst_80 = arith.constant 0.000000e+00 : f32
    %212 = vector.broadcast %cst_80 : f32 to vector<8x128xf32>
    %213 = arith.subf %212, %211 : vector<8x128xf32>
    %214 = math.exp %213 : vector<8x128xf32>
    %215 = arith.mulf %210, %214 : vector<8x128xf32>
    %cst_81 = arith.constant 1.000000e+00 : f32
    %216 = vector.broadcast %cst_81 : f32 to vector<8x128xf32>
    %217 = arith.subf %216, %215 : vector<8x128xf32>
    %cst_82 = arith.constant 0.000000e+00 : f32
    %218 = vector.broadcast %cst_82 : f32 to vector<8x128xf32>
    %219 = arith.cmpf olt, %189, %218 : vector<8x128xf32>
    %cst_83 = arith.constant 0.000000e+00 : f32
    %220 = vector.broadcast %cst_83 : f32 to vector<8x128xf32>
    %221 = arith.subf %220, %217 : vector<8x128xf32>
    %222 = arith.select %219, %221, %217 : vector<8x128xi1>, vector<8x128xf32>
    %cst_84 = arith.constant 5.000000e-01 : f32
    %223 = vector.broadcast %cst_84 : f32 to vector<8x128xf32>
    %224 = arith.mulf %223, %187 : vector<8x128xf32>
    %cst_85 = arith.constant 1.000000e+00 : f32
    %225 = vector.broadcast %cst_85 : f32 to vector<8x128xf32>
    %226 = arith.addf %225, %222 : vector<8x128xf32>
    %227 = arith.mulf %224, %226 : vector<8x128xf32>
    %228 = arith.truncf %227 : vector<8x128xf32> to vector<8x128xbf16>
    %cst_86 = arith.constant dense<0.000000e+00> : vector<8x16xf32>
    %229 = tpu.matmul %228, %15, %cst_86 {dimension_numbers = #tpu.dot_dimension_numbers<[1], [0], [0], [1], [0, 0, 1, 1], [], []>} : vector<8x128xbf16>, vector<128x16xbf16>, vector<8x16xf32> -> vector<8x16xf32>
    %230 = vector.broadcast %10 : vector<1x16xf32> to vector<8x16xf32>
    %231 = arith.addf %229, %230 : vector<8x16xf32>
    %cst_87 = arith.constant 0.707106769 : f32
    %232 = vector.broadcast %cst_87 : f32 to vector<8x16xf32>
    %233 = arith.mulf %231, %232 : vector<8x16xf32>
    %234 = math.absf %233 : vector<8x16xf32>
    %cst_88 = arith.constant 0.327591091 : f32
    %235 = vector.broadcast %cst_88 : f32 to vector<8x16xf32>
    %236 = arith.mulf %235, %234 : vector<8x16xf32>
    %cst_89 = arith.constant 1.000000e+00 : f32
    %237 = vector.broadcast %cst_89 : f32 to vector<8x16xf32>
    %238 = arith.addf %237, %236 : vector<8x16xf32>
    %cst_90 = arith.constant 1.000000e+00 : f32
    %239 = vector.broadcast %cst_90 : f32 to vector<8x16xf32>
    %240 = arith.divf %239, %238 : vector<8x16xf32>
    %cst_91 = arith.constant 1.06140542 : f32
    %241 = vector.broadcast %cst_91 : f32 to vector<8x16xf32>
    %242 = arith.mulf %240, %241 : vector<8x16xf32>
    %cst_92 = arith.constant -1.45315206 : f32
    %243 = vector.broadcast %cst_92 : f32 to vector<8x16xf32>
    %244 = arith.addf %243, %242 : vector<8x16xf32>
    %245 = arith.mulf %240, %244 : vector<8x16xf32>
    %cst_93 = arith.constant 1.42141378 : f32
    %246 = vector.broadcast %cst_93 : f32 to vector<8x16xf32>
    %247 = arith.addf %246, %245 : vector<8x16xf32>
    %248 = arith.mulf %240, %247 : vector<8x16xf32>
    %cst_94 = arith.constant -0.284496725 : f32
    %249 = vector.broadcast %cst_94 : f32 to vector<8x16xf32>
    %250 = arith.addf %249, %248 : vector<8x16xf32>
    %251 = arith.mulf %240, %250 : vector<8x16xf32>
    %cst_95 = arith.constant 0.254829586 : f32
    %252 = vector.broadcast %cst_95 : f32 to vector<8x16xf32>
    %253 = arith.addf %252, %251 : vector<8x16xf32>
    %254 = arith.mulf %240, %253 : vector<8x16xf32>
    %255 = arith.mulf %234, %234 : vector<8x16xf32>
    %cst_96 = arith.constant 0.000000e+00 : f32
    %256 = vector.broadcast %cst_96 : f32 to vector<8x16xf32>
    %257 = arith.subf %256, %255 : vector<8x16xf32>
    %258 = math.exp %257 : vector<8x16xf32>
    %259 = arith.mulf %254, %258 : vector<8x16xf32>
    %cst_97 = arith.constant 1.000000e+00 : f32
    %260 = vector.broadcast %cst_97 : f32 to vector<8x16xf32>
    %261 = arith.subf %260, %259 : vector<8x16xf32>
    %cst_98 = arith.constant 0.000000e+00 : f32
    %262 = vector.broadcast %cst_98 : f32 to vector<8x16xf32>
    %263 = arith.cmpf olt, %233, %262 : vector<8x16xf32>
    %cst_99 = arith.constant 0.000000e+00 : f32
    %264 = vector.broadcast %cst_99 : f32 to vector<8x16xf32>
    %265 = arith.subf %264, %261 : vector<8x16xf32>
    %266 = arith.select %263, %265, %261 : vector<8x16xi1>, vector<8x16xf32>
    %cst_100 = arith.constant 5.000000e-01 : f32
    %267 = vector.broadcast %cst_100 : f32 to vector<8x16xf32>
    %268 = arith.mulf %267, %231 : vector<8x16xf32>
    %cst_101 = arith.constant 1.000000e+00 : f32
    %269 = vector.broadcast %cst_101 : f32 to vector<8x16xf32>
    %270 = arith.addf %269, %266 : vector<8x16xf32>
    %271 = arith.mulf %268, %270 : vector<8x16xf32>
    %272 = arith.truncf %271 : vector<8x16xf32> to vector<8x16xbf16>
    %cst_102 = arith.constant dense<0.000000e+00> : vector<8x128xf32>
    %273 = tpu.matmul %272, %17, %cst_102 {dimension_numbers = #tpu.dot_dimension_numbers<[1], [0], [0], [1], [0, 0, 1, 1], [], []>} : vector<8x16xbf16>, vector<16x128xbf16>, vector<8x128xf32> -> vector<8x128xf32>
    %274 = vector.broadcast %11 : vector<1x128xf32> to vector<8x128xf32>
    %275 = arith.addf %273, %274 : vector<8x128xf32>
    %c0_103 = arith.constant 0 : index
    %c0_104 = arith.constant 0 : index
    %276 = vector.load %arg4[%c0_103, %c0_104] : memref<16x128xf32, #tpu.memory_space<vmem>>, vector<8x128xf32>
    tpu.vector_store %arg4[%c0_103, %c0_104], %275 {strides = array<i32>} : memref<16x128xf32, #tpu.memory_space<vmem>>, vector<8x128xf32>,
    %c8_105 = arith.constant 8 : index
    %c0_106 = arith.constant 0 : index
    %277 = vector.load %arg1[%c8_105, %c0_106] : memref<16x8xf32, #tpu.memory_space<vmem>>, vector<8x8xf32>
    %278 = vector.extract_strided_slice %277 {offsets = [0, 0], sizes = [8, 1], strides = [1, 1]} : vector<8x8xf32> to vector<8x1xf32>
    %279 = vector.extract_strided_slice %277 {offsets = [0, 1], sizes = [8, 1], strides = [1, 1]} : vector<8x8xf32> to vector<8x1xf32>
    %280 = vector.extract_strided_slice %277 {offsets = [0, 2], sizes = [8, 1], strides = [1, 1]} : vector<8x8xf32> to vector<8x1xf32>
    %281 = vector.extract_strided_slice %277 {offsets = [0, 3], sizes = [8, 1], strides = [1, 1]} : vector<8x8xf32> to vector<8x1xf32>
    %282 = vector.extract_strided_slice %277 {offsets = [0, 4], sizes = [8, 1], strides = [1, 1]} : vector<8x8xf32> to vector<8x1xf32>
    %283 = math.log %280 : vector<8x1xf32>
    %cst_107 = arith.constant 5.000000e-01 : f32
    %284 = vector.broadcast %cst_107 : f32 to vector<8x1xf32>
    %285 = arith.mulf %284, %283 : vector<8x1xf32>
    %286 = math.sin %285 : vector<8x1xf32>
    %287 = math.cos %285 : vector<8x1xf32>
    %288 = vector.broadcast %281 : vector<8x1xf32> to vector<8x16xf32>
    %289 = vector.broadcast %0 : vector<1x16xf32> to vector<8x16xf32>
    %290 = arith.mulf %288, %289 : vector<8x16xf32>
    %291 = vector.broadcast %5 : vector<1x16xf32> to vector<8x16xf32>
    %292 = arith.addf %290, %291 : vector<8x16xf32>
    %293 = vector.broadcast %282 : vector<8x1xf32> to vector<8x16xf32>
    %294 = arith.mulf %292, %293 : vector<8x16xf32>
    %295 = vector.broadcast %278 : vector<8x1xf32> to vector<8x16xf32>
    %296 = vector.broadcast %1 : vector<1x16xf32> to vector<8x16xf32>
    %297 = arith.mulf %295, %296 : vector<8x16xf32>
    %298 = vector.broadcast %279 : vector<8x1xf32> to vector<8x16xf32>
    %299 = vector.broadcast %2 : vector<1x16xf32> to vector<8x16xf32>
    %300 = arith.mulf %298, %299 : vector<8x16xf32>
    %301 = arith.addf %297, %300 : vector<8x16xf32>
    %302 = vector.broadcast %286 : vector<8x1xf32> to vector<8x16xf32>
    %303 = vector.broadcast %3 : vector<1x16xf32> to vector<8x16xf32>
    %304 = arith.mulf %302, %303 : vector<8x16xf32>
    %305 = arith.addf %301, %304 : vector<8x16xf32>
    %306 = vector.broadcast %287 : vector<8x1xf32> to vector<8x16xf32>
    %307 = vector.broadcast %4 : vector<1x16xf32> to vector<8x16xf32>
    %308 = arith.mulf %306, %307 : vector<8x16xf32>
    %309 = arith.addf %305, %308 : vector<8x16xf32>
    %310 = arith.truncf %294 : vector<8x16xf32> to vector<8x16xbf16>
    %cst_108 = arith.constant dense<0.000000e+00> : vector<8x16xf32>
    %311 = tpu.matmul %310, %16, %cst_108 {dimension_numbers = #tpu.dot_dimension_numbers<[1], [0], [0], [1], [0, 0, 1, 1], [], []>} : vector<8x16xbf16>, vector<16x16xbf16>, vector<8x16xf32> -> vector<8x16xf32>
    %312 = arith.addf %309, %311 : vector<8x16xf32>
    %313 = vector.broadcast %6 : vector<1x16xf32> to vector<8x16xf32>
    %314 = arith.addf %312, %313 : vector<8x16xf32>
    %cst_109 = arith.constant 0.707106769 : f32
    %315 = vector.broadcast %cst_109 : f32 to vector<8x16xf32>
    %316 = arith.mulf %314, %315 : vector<8x16xf32>
    %317 = math.absf %316 : vector<8x16xf32>
    %cst_110 = arith.constant 0.327591091 : f32
    %318 = vector.broadcast %cst_110 : f32 to vector<8x16xf32>
    %319 = arith.mulf %318, %317 : vector<8x16xf32>
    %cst_111 = arith.constant 1.000000e+00 : f32
    %320 = vector.broadcast %cst_111 : f32 to vector<8x16xf32>
    %321 = arith.addf %320, %319 : vector<8x16xf32>
    %cst_112 = arith.constant 1.000000e+00 : f32
    %322 = vector.broadcast %cst_112 : f32 to vector<8x16xf32>
    %323 = arith.divf %322, %321 : vector<8x16xf32>
    %cst_113 = arith.constant 1.06140542 : f32
    %324 = vector.broadcast %cst_113 : f32 to vector<8x16xf32>
    %325 = arith.mulf %323, %324 : vector<8x16xf32>
    %cst_114 = arith.constant -1.45315206 : f32
    %326 = vector.broadcast %cst_114 : f32 to vector<8x16xf32>
    %327 = arith.addf %326, %325 : vector<8x16xf32>
    %328 = arith.mulf %323, %327 : vector<8x16xf32>
    %cst_115 = arith.constant 1.42141378 : f32
    %329 = vector.broadcast %cst_115 : f32 to vector<8x16xf32>
    %330 = arith.addf %329, %328 : vector<8x16xf32>
    %331 = arith.mulf %323, %330 : vector<8x16xf32>
    %cst_116 = arith.constant -0.284496725 : f32
    %332 = vector.broadcast %cst_116 : f32 to vector<8x16xf32>
    %333 = arith.addf %332, %331 : vector<8x16xf32>
    %334 = arith.mulf %323, %333 : vector<8x16xf32>
    %cst_117 = arith.constant 0.254829586 : f32
    %335 = vector.broadcast %cst_117 : f32 to vector<8x16xf32>
    %336 = arith.addf %335, %334 : vector<8x16xf32>
    %337 = arith.mulf %323, %336 : vector<8x16xf32>
    %338 = arith.mulf %317, %317 : vector<8x16xf32>
    %cst_118 = arith.constant 0.000000e+00 : f32
    %339 = vector.broadcast %cst_118 : f32 to vector<8x16xf32>
    %340 = arith.subf %339, %338 : vector<8x16xf32>
    %341 = math.exp %340 : vector<8x16xf32>
    %342 = arith.mulf %337, %341 : vector<8x16xf32>
    %cst_119 = arith.constant 1.000000e+00 : f32
    %343 = vector.broadcast %cst_119 : f32 to vector<8x16xf32>
    %344 = arith.subf %343, %342 : vector<8x16xf32>
    %cst_120 = arith.constant 0.000000e+00 : f32
    %345 = vector.broadcast %cst_120 : f32 to vector<8x16xf32>
    %346 = arith.cmpf olt, %316, %345 : vector<8x16xf32>
    %cst_121 = arith.constant 0.000000e+00 : f32
    %347 = vector.broadcast %cst_121 : f32 to vector<8x16xf32>
    %348 = arith.subf %347, %344 : vector<8x16xf32>
    %349 = arith.select %346, %348, %344 : vector<8x16xi1>, vector<8x16xf32>
    %cst_122 = arith.constant 5.000000e-01 : f32
    %350 = vector.broadcast %cst_122 : f32 to vector<8x16xf32>
    %351 = arith.mulf %350, %314 : vector<8x16xf32>
    %cst_123 = arith.constant 1.000000e+00 : f32
    %352 = vector.broadcast %cst_123 : f32 to vector<8x16xf32>
    %353 = arith.addf %352, %349 : vector<8x16xf32>
    %354 = arith.mulf %351, %353 : vector<8x16xf32>
    %355 = arith.truncf %354 : vector<8x16xf32> to vector<8x16xbf16>
    %cst_124 = arith.constant dense<0.000000e+00> : vector<8x128xf32>
    %356 = tpu.matmul %355, %14, %cst_124 {dimension_numbers = #tpu.dot_dimension_numbers<[1], [0], [0], [1], [0, 0, 1, 1], [], []>} : vector<8x16xbf16>, vector<16x128xbf16>, vector<8x128xf32> -> vector<8x128xf32>
    %357 = vector.broadcast %7 : vector<1x128xf32> to vector<8x128xf32>
    %358 = arith.addf %356, %357 : vector<8x128xf32>
    %cst_125 = arith.constant 0.707106769 : f32
    %359 = vector.broadcast %cst_125 : f32 to vector<8x128xf32>
    %360 = arith.mulf %358, %359 : vector<8x128xf32>
    %361 = math.absf %360 : vector<8x128xf32>
    %cst_126 = arith.constant 0.327591091 : f32
    %362 = vector.broadcast %cst_126 : f32 to vector<8x128xf32>
    %363 = arith.mulf %362, %361 : vector<8x128xf32>
    %cst_127 = arith.constant 1.000000e+00 : f32
    %364 = vector.broadcast %cst_127 : f32 to vector<8x128xf32>
    %365 = arith.addf %364, %363 : vector<8x128xf32>
    %cst_128 = arith.constant 1.000000e+00 : f32
    %366 = vector.broadcast %cst_128 : f32 to vector<8x128xf32>
    %367 = arith.divf %366, %365 : vector<8x128xf32>
    %cst_129 = arith.constant 1.06140542 : f32
    %368 = vector.broadcast %cst_129 : f32 to vector<8x128xf32>
    %369 = arith.mulf %367, %368 : vector<8x128xf32>
    %cst_130 = arith.constant -1.45315206 : f32
    %370 = vector.broadcast %cst_130 : f32 to vector<8x128xf32>
    %371 = arith.addf %370, %369 : vector<8x128xf32>
    %372 = arith.mulf %367, %371 : vector<8x128xf32>
    %cst_131 = arith.constant 1.42141378 : f32
    %373 = vector.broadcast %cst_131 : f32 to vector<8x128xf32>
    %374 = arith.addf %373, %372 : vector<8x128xf32>
    %375 = arith.mulf %367, %374 : vector<8x128xf32>
    %cst_132 = arith.constant -0.284496725 : f32
    %376 = vector.broadcast %cst_132 : f32 to vector<8x128xf32>
    %377 = arith.addf %376, %375 : vector<8x128xf32>
    %378 = arith.mulf %367, %377 : vector<8x128xf32>
    %cst_133 = arith.constant 0.254829586 : f32
    %379 = vector.broadcast %cst_133 : f32 to vector<8x128xf32>
    %380 = arith.addf %379, %378 : vector<8x128xf32>
    %381 = arith.mulf %367, %380 : vector<8x128xf32>
    %382 = arith.mulf %361, %361 : vector<8x128xf32>
    %cst_134 = arith.constant 0.000000e+00 : f32
    %383 = vector.broadcast %cst_134 : f32 to vector<8x128xf32>
    %384 = arith.subf %383, %382 : vector<8x128xf32>
    %385 = math.exp %384 : vector<8x128xf32>
    %386 = arith.mulf %381, %385 : vector<8x128xf32>
    %cst_135 = arith.constant 1.000000e+00 : f32
    %387 = vector.broadcast %cst_135 : f32 to vector<8x128xf32>
    %388 = arith.subf %387, %386 : vector<8x128xf32>
    %cst_136 = arith.constant 0.000000e+00 : f32
    %389 = vector.broadcast %cst_136 : f32 to vector<8x128xf32>
    %390 = arith.cmpf olt, %360, %389 : vector<8x128xf32>
    %cst_137 = arith.constant 0.000000e+00 : f32
    %391 = vector.broadcast %cst_137 : f32 to vector<8x128xf32>
    %392 = arith.subf %391, %388 : vector<8x128xf32>
    %393 = arith.select %390, %392, %388 : vector<8x128xi1>, vector<8x128xf32>
    %cst_138 = arith.constant 5.000000e-01 : f32
    %394 = vector.broadcast %cst_138 : f32 to vector<8x128xf32>
    %395 = arith.mulf %394, %358 : vector<8x128xf32>
    %cst_139 = arith.constant 1.000000e+00 : f32
    %396 = vector.broadcast %cst_139 : f32 to vector<8x128xf32>
    %397 = arith.addf %396, %393 : vector<8x128xf32>
    %398 = arith.mulf %395, %397 : vector<8x128xf32>
    %399 = arith.truncf %398 : vector<8x128xf32> to vector<8x128xbf16>
    %cst_140 = arith.constant dense<0.000000e+00> : vector<8x256xf32>
    %400 = tpu.matmul %399, %12, %cst_140 {dimension_numbers = #tpu.dot_dimension_numbers<[1], [0], [0], [1], [0, 0, 1, 1], [], []>} : vector<8x128xbf16>, vector<128x256xbf16>, vector<8x256xf32> -> vector<8x256xf32>
    %401 = vector.broadcast %8 : vector<1x256xf32> to vector<8x256xf32>
    %402 = arith.addf %400, %401 : vector<8x256xf32>
    %cst_141 = arith.constant 0.707106769 : f32
    %403 = vector.broadcast %cst_141 : f32 to vector<8x256xf32>
    %404 = arith.mulf %402, %403 : vector<8x256xf32>
    %405 = math.absf %404 : vector<8x256xf32>
    %cst_142 = arith.constant 0.327591091 : f32
    %406 = vector.broadcast %cst_142 : f32 to vector<8x256xf32>
    %407 = arith.mulf %406, %405 : vector<8x256xf32>
    %cst_143 = arith.constant 1.000000e+00 : f32
    %408 = vector.broadcast %cst_143 : f32 to vector<8x256xf32>
    %409 = arith.addf %408, %407 : vector<8x256xf32>
    %cst_144 = arith.constant 1.000000e+00 : f32
    %410 = vector.broadcast %cst_144 : f32 to vector<8x256xf32>
    %411 = arith.divf %410, %409 : vector<8x256xf32>
    %cst_145 = arith.constant 1.06140542 : f32
    %412 = vector.broadcast %cst_145 : f32 to vector<8x256xf32>
    %413 = arith.mulf %411, %412 : vector<8x256xf32>
    %cst_146 = arith.constant -1.45315206 : f32
    %414 = vector.broadcast %cst_146 : f32 to vector<8x256xf32>
    %415 = arith.addf %414, %413 : vector<8x256xf32>
    %416 = arith.mulf %411, %415 : vector<8x256xf32>
    %cst_147 = arith.constant 1.42141378 : f32
    %417 = vector.broadcast %cst_147 : f32 to vector<8x256xf32>
    %418 = arith.addf %417, %416 : vector<8x256xf32>
    %419 = arith.mulf %411, %418 : vector<8x256xf32>
    %cst_148 = arith.constant -0.284496725 : f32
    %420 = vector.broadcast %cst_148 : f32 to vector<8x256xf32>
    %421 = arith.addf %420, %419 : vector<8x256xf32>
    %422 = arith.mulf %411, %421 : vector<8x256xf32>
    %cst_149 = arith.constant 0.254829586 : f32
    %423 = vector.broadcast %cst_149 : f32 to vector<8x256xf32>
    %424 = arith.addf %423, %422 : vector<8x256xf32>
    %425 = arith.mulf %411, %424 : vector<8x256xf32>
    %426 = arith.mulf %405, %405 : vector<8x256xf32>
    %cst_150 = arith.constant 0.000000e+00 : f32
    %427 = vector.broadcast %cst_150 : f32 to vector<8x256xf32>
    %428 = arith.subf %427, %426 : vector<8x256xf32>
    %429 = math.exp %428 : vector<8x256xf32>
    %430 = arith.mulf %425, %429 : vector<8x256xf32>
    %cst_151 = arith.constant 1.000000e+00 : f32
    %431 = vector.broadcast %cst_151 : f32 to vector<8x256xf32>
    %432 = arith.subf %431, %430 : vector<8x256xf32>
    %cst_152 = arith.constant 0.000000e+00 : f32
    %433 = vector.broadcast %cst_152 : f32 to vector<8x256xf32>
    %434 = arith.cmpf olt, %404, %433 : vector<8x256xf32>
    %cst_153 = arith.constant 0.000000e+00 : f32
    %435 = vector.broadcast %cst_153 : f32 to vector<8x256xf32>
    %436 = arith.subf %435, %432 : vector<8x256xf32>
    %437 = arith.select %434, %436, %432 : vector<8x256xi1>, vector<8x256xf32>
    %cst_154 = arith.constant 5.000000e-01 : f32
    %438 = vector.broadcast %cst_154 : f32 to vector<8x256xf32>
    %439 = arith.mulf %438, %402 : vector<8x256xf32>
    %cst_155 = arith.constant 1.000000e+00 : f32
    %440 = vector.broadcast %cst_155 : f32 to vector<8x256xf32>
    %441 = arith.addf %440, %437 : vector<8x256xf32>
    %442 = arith.mulf %439, %441 : vector<8x256xf32>
    %443 = arith.truncf %442 : vector<8x256xf32> to vector<8x256xbf16>
    %cst_156 = arith.constant dense<0.000000e+00> : vector<8x128xf32>
    %444 = tpu.matmul %443, %13, %cst_156 {dimension_numbers = #tpu.dot_dimension_numbers<[1], [0], [0], [1], [0, 0, 1, 1], [], []>} : vector<8x256xbf16>, vector<256x128xbf16>, vector<8x128xf32> -> vector<8x128xf32>
    %445 = vector.broadcast %9 : vector<1x128xf32> to vector<8x128xf32>
    %446 = arith.addf %444, %445 : vector<8x128xf32>
    %cst_157 = arith.constant 0.707106769 : f32
    %447 = vector.broadcast %cst_157 : f32 to vector<8x128xf32>
    %448 = arith.mulf %446, %447 : vector<8x128xf32>
    %449 = math.absf %448 : vector<8x128xf32>
    %cst_158 = arith.constant 0.327591091 : f32
    %450 = vector.broadcast %cst_158 : f32 to vector<8x128xf32>
    %451 = arith.mulf %450, %449 : vector<8x128xf32>
    %cst_159 = arith.constant 1.000000e+00 : f32
    %452 = vector.broadcast %cst_159 : f32 to vector<8x128xf32>
    %453 = arith.addf %452, %451 : vector<8x128xf32>
    %cst_160 = arith.constant 1.000000e+00 : f32
    %454 = vector.broadcast %cst_160 : f32 to vector<8x128xf32>
    %455 = arith.divf %454, %453 : vector<8x128xf32>
    %cst_161 = arith.constant 1.06140542 : f32
    %456 = vector.broadcast %cst_161 : f32 to vector<8x128xf32>
    %457 = arith.mulf %455, %456 : vector<8x128xf32>
    %cst_162 = arith.constant -1.45315206 : f32
    %458 = vector.broadcast %cst_162 : f32 to vector<8x128xf32>
    %459 = arith.addf %458, %457 : vector<8x128xf32>
    %460 = arith.mulf %455, %459 : vector<8x128xf32>
    %cst_163 = arith.constant 1.42141378 : f32
    %461 = vector.broadcast %cst_163 : f32 to vector<8x128xf32>
    %462 = arith.addf %461, %460 : vector<8x128xf32>
    %463 = arith.mulf %455, %462 : vector<8x128xf32>
    %cst_164 = arith.constant -0.284496725 : f32
    %464 = vector.broadcast %cst_164 : f32 to vector<8x128xf32>
    %465 = arith.addf %464, %463 : vector<8x128xf32>
    %466 = arith.mulf %455, %465 : vector<8x128xf32>
    %cst_165 = arith.constant 0.254829586 : f32
    %467 = vector.broadcast %cst_165 : f32 to vector<8x128xf32>
    %468 = arith.addf %467, %466 : vector<8x128xf32>
    %469 = arith.mulf %455, %468 : vector<8x128xf32>
    %470 = arith.mulf %449, %449 : vector<8x128xf32>
    %cst_166 = arith.constant 0.000000e+00 : f32
    %471 = vector.broadcast %cst_166 : f32 to vector<8x128xf32>
    %472 = arith.subf %471, %470 : vector<8x128xf32>
    %473 = math.exp %472 : vector<8x128xf32>
    %474 = arith.mulf %469, %473 : vector<8x128xf32>
    %cst_167 = arith.constant 1.000000e+00 : f32
    %475 = vector.broadcast %cst_167 : f32 to vector<8x128xf32>
    %476 = arith.subf %475, %474 : vector<8x128xf32>
    %cst_168 = arith.constant 0.000000e+00 : f32
    %477 = vector.broadcast %cst_168 : f32 to vector<8x128xf32>
    %478 = arith.cmpf olt, %448, %477 : vector<8x128xf32>
    %cst_169 = arith.constant 0.000000e+00 : f32
    %479 = vector.broadcast %cst_169 : f32 to vector<8x128xf32>
    %480 = arith.subf %479, %476 : vector<8x128xf32>
    %481 = arith.select %478, %480, %476 : vector<8x128xi1>, vector<8x128xf32>
    %cst_170 = arith.constant 5.000000e-01 : f32
    %482 = vector.broadcast %cst_170 : f32 to vector<8x128xf32>
    %483 = arith.mulf %482, %446 : vector<8x128xf32>
    %cst_171 = arith.constant 1.000000e+00 : f32
    %484 = vector.broadcast %cst_171 : f32 to vector<8x128xf32>
    %485 = arith.addf %484, %481 : vector<8x128xf32>
    %486 = arith.mulf %483, %485 : vector<8x128xf32>
    %487 = arith.truncf %486 : vector<8x128xf32> to vector<8x128xbf16>
    %cst_172 = arith.constant dense<0.000000e+00> : vector<8x16xf32>
    %488 = tpu.matmul %487, %15, %cst_172 {dimension_numbers = #tpu.dot_dimension_numbers<[1], [0], [0], [1], [0, 0, 1, 1], [], []>} : vector<8x128xbf16>, vector<128x16xbf16>, vector<8x16xf32> -> vector<8x16xf32>
    %489 = vector.broadcast %10 : vector<1x16xf32> to vector<8x16xf32>
    %490 = arith.addf %488, %489 : vector<8x16xf32>
    %cst_173 = arith.constant 0.707106769 : f32
    %491 = vector.broadcast %cst_173 : f32 to vector<8x16xf32>
    %492 = arith.mulf %490, %491 : vector<8x16xf32>
    %493 = math.absf %492 : vector<8x16xf32>
    %cst_174 = arith.constant 0.327591091 : f32
    %494 = vector.broadcast %cst_174 : f32 to vector<8x16xf32>
    %495 = arith.mulf %494, %493 : vector<8x16xf32>
    %cst_175 = arith.constant 1.000000e+00 : f32
    %496 = vector.broadcast %cst_175 : f32 to vector<8x16xf32>
    %497 = arith.addf %496, %495 : vector<8x16xf32>
    %cst_176 = arith.constant 1.000000e+00 : f32
    %498 = vector.broadcast %cst_176 : f32 to vector<8x16xf32>
    %499 = arith.divf %498, %497 : vector<8x16xf32>
    %cst_177 = arith.constant 1.06140542 : f32
    %500 = vector.broadcast %cst_177 : f32 to vector<8x16xf32>
    %501 = arith.mulf %499, %500 : vector<8x16xf32>
    %cst_178 = arith.constant -1.45315206 : f32
    %502 = vector.broadcast %cst_178 : f32 to vector<8x16xf32>
    %503 = arith.addf %502, %501 : vector<8x16xf32>
    %504 = arith.mulf %499, %503 : vector<8x16xf32>
    %cst_179 = arith.constant 1.42141378 : f32
    %505 = vector.broadcast %cst_179 : f32 to vector<8x16xf32>
    %506 = arith.addf %505, %504 : vector<8x16xf32>
    %507 = arith.mulf %499, %506 : vector<8x16xf32>
    %cst_180 = arith.constant -0.284496725 : f32
    %508 = vector.broadcast %cst_180 : f32 to vector<8x16xf32>
    %509 = arith.addf %508, %507 : vector<8x16xf32>
    %510 = arith.mulf %499, %509 : vector<8x16xf32>
    %cst_181 = arith.constant 0.254829586 : f32
    %511 = vector.broadcast %cst_181 : f32 to vector<8x16xf32>
    %512 = arith.addf %511, %510 : vector<8x16xf32>
    %513 = arith.mulf %499, %512 : vector<8x16xf32>
    %514 = arith.mulf %493, %493 : vector<8x16xf32>
    %cst_182 = arith.constant 0.000000e+00 : f32
    %515 = vector.broadcast %cst_182 : f32 to vector<8x16xf32>
    %516 = arith.subf %515, %514 : vector<8x16xf32>
    %517 = math.exp %516 : vector<8x16xf32>
    %518 = arith.mulf %513, %517 : vector<8x16xf32>
    %cst_183 = arith.constant 1.000000e+00 : f32
    %519 = vector.broadcast %cst_183 : f32 to vector<8x16xf32>
    %520 = arith.subf %519, %518 : vector<8x16xf32>
    %cst_184 = arith.constant 0.000000e+00 : f32
    %521 = vector.broadcast %cst_184 : f32 to vector<8x16xf32>
    %522 = arith.cmpf olt, %492, %521 : vector<8x16xf32>
    %cst_185 = arith.constant 0.000000e+00 : f32
    %523 = vector.broadcast %cst_185 : f32 to vector<8x16xf32>
    %524 = arith.subf %523, %520 : vector<8x16xf32>
    %525 = arith.select %522, %524, %520 : vector<8x16xi1>, vector<8x16xf32>
    %cst_186 = arith.constant 5.000000e-01 : f32
    %526 = vector.broadcast %cst_186 : f32 to vector<8x16xf32>
    %527 = arith.mulf %526, %490 : vector<8x16xf32>
    %cst_187 = arith.constant 1.000000e+00 : f32
    %528 = vector.broadcast %cst_187 : f32 to vector<8x16xf32>
    %529 = arith.addf %528, %525 : vector<8x16xf32>
    %530 = arith.mulf %527, %529 : vector<8x16xf32>
    %531 = arith.truncf %530 : vector<8x16xf32> to vector<8x16xbf16>
    %cst_188 = arith.constant dense<0.000000e+00> : vector<8x128xf32>
    %532 = tpu.matmul %531, %17, %cst_188 {dimension_numbers = #tpu.dot_dimension_numbers<[1], [0], [0], [1], [0, 0, 1, 1], [], []>} : vector<8x16xbf16>, vector<16x128xbf16>, vector<8x128xf32> -> vector<8x128xf32>
    %533 = vector.broadcast %11 : vector<1x128xf32> to vector<8x128xf32>
    %534 = arith.addf %532, %533 : vector<8x128xf32>
    %c8_189 = arith.constant 8 : index
    %c0_190 = arith.constant 0 : index
    %535 = vector.load %arg4[%c8_189, %c0_190] : memref<16x128xf32, #tpu.memory_space<vmem>>, vector<8x128xf32>
    tpu.vector_store %arg4[%c8_189, %c0_190], %534 {strides = array<i32>} : memref<16x128xf32, #tpu.memory_space<vmem>>, vector<8x128xf32>,
    return
  }
  func.func @transform_0(%arg0: i32) -> (i32, i32) {
    %c0_i32 = arith.constant 0 : i32
    %c0_i32_0 = arith.constant 0 : i32
    return %arg0, %c0_i32 : i32, i32
  }
  func.func @transform_1(%arg0: i32) -> (i32, i32) {
    %c0_i32 = arith.constant 0 : i32
    %c0_i32_0 = arith.constant 0 : i32
    %c0_i32_1 = arith.constant 0 : i32
    return %c0_i32, %c0_i32_0 : i32, i32
  }
  func.func @transform_2(%arg0: i32) -> (i32, i32) {
    %c0_i32 = arith.constant 0 : i32
    %c0_i32_0 = arith.constant 0 : i32
    %c0_i32_1 = arith.constant 0 : i32
    return %c0_i32, %c0_i32_0 : i32, i32
  }
  func.func @transform_3(%arg0: i32) -> (i32, i32) {
    %c0_i32 = arith.constant 0 : i32
    %c0_i32_0 = arith.constant 0 : i32
    return %arg0, %c0_i32 : i32, i32
  }
}

</mosaic_0001>

<llo_original>
// kernel: tpu_custom_call.1
$region0: #{tpu_custom_call.1}
  #allocation0 [shape = 'u32[]', space=smem, size = 0x4, offset = 0x4, fixed_abs, tag = 'smem constant byte address 0x4 - core index']
  #allocation1 [shape = 'u32[144,128]{1,0:T(1,128)}', space=vmem, size = 0x12000, scoped, tag = 'internal scratch']
  %s0 = inlined_call_operand.vmem [shape: f32[16,8], index: 0, kind: input, shape index: {}]
  %s1 = inlined_call_operand.hbm [shape: bf16[256,384], index: 1, kind: input, shape index: {}]
  %s2 = inlined_call_operand.hbm [shape: f32[16,256], index: 2, kind: input, shape index: {}]
  %s3 = inlined_call_operand.hbm [shape: f32[16,128], index: 3, kind: output, shape index: {}]
  %s4 = sld [smem:[#allocation0]]
  $region30: #{tpu_custom_call.1} parent=0
    _
  %s6 = ssub.s32 1, %s4
  %s7 = scalar_select 0, %s6, %s4
  $region1: #{tpu_custom_call.1} parent=0
    #allocation2 [shape = 'u8[196608]{0}', space=vmem, size = 0x30000, scoped, tag = 'input window, operand 1, single buffered']
    #allocation3 [shape = 's32[1]{0}', space=sflag, size = 0x4, scoped, tag = 'scoped memory for tpu_custom_call.1']
    #allocation4 [shape = 's32[1]{0}', space=sflag, size = 0x4, scoped, tag = 'scoped memory for tpu_custom_call.1']
    #allocation5 [shape = 'u8[16384]{0}', space=vmem, size = 0x4000, scoped, tag = 'input window, operand 2, single buffered']
    #allocation6 [shape = 's32[1]{0}', space=sflag, size = 0x4, scoped, tag = 'scoped memory for tpu_custom_call.1']
    #allocation7 [shape = 'u8[8192]{0}', space=vmem, size = 0x2000, scoped, tag = 'output window, operand 0, single buffered']
    %8 = vsyncpa [#allocation3], 0
    %9 = vsyncpa [#allocation6], 0
    %10 = vsyncpa [#allocation4], 0
    // Predicated region
    $region2: #{tpu_custom_call.1} parent=1 // pred_check
      _
    $region3: #{tpu_custom_call.1} parent=1 // pred_check_branch
      %12 = sbr.rel (0) target = $region5
    $region4: #{tpu_custom_call.1} parent=1 // pred_region
      _
    $region5: #{tpu_custom_call.1} parent=1 // pred_fallthru
      _
    // Predicated region
    $region6: #{tpu_custom_call.1} parent=1 // pred_check
      _
    $region7: #{tpu_custom_call.1} parent=1 // pred_check_branch
      %14 = sbr.rel (0) target = $region9
    $region8: #{tpu_custom_call.1} parent=1 // pred_region
      %s16 = ssub.s32 6144, 6144
      %17 = vsyncadd [#allocation3], %s16
      %s18 = sshll.u32 [#allocation2], 4
      %s19 = int_to_ptr.vmem [resolvable:$true] %s18
      %24 = dma.hbm_to_vmem [thread:$0]  %s1, 6144, %s19, [#allocation3], 192, 192, 12
    $region9: #{tpu_custom_call.1} parent=1 // pred_fallthru
      _
    // Predicated region
    $region10: #{tpu_custom_call.1} parent=1 // pred_check
      _
    $region11: #{tpu_custom_call.1} parent=1 // pred_check_branch
      %26 = sbr.rel (0) target = $region13
    $region12: #{tpu_custom_call.1} parent=1 // pred_region
      %s28 = ssub.s32 512, 512
      %29 = vsyncadd [#allocation6], %s28
      %s30 = sshll.u32 [#allocation5], 4
      %s31 = int_to_ptr.vmem [resolvable:$true] %s30
      %36 = dma.hbm_to_vmem [thread:$0]  %s2, 512, %s31, [#allocation6], 256, 256, 16
    $region13: #{tpu_custom_call.1} parent=1 // pred_fallthru
      _
    // Predicated region
    $region14: #{tpu_custom_call.1} parent=1 // pred_check
      _
    $region15: #{tpu_custom_call.1} parent=1 // pred_check_branch
      %38 = sbr.rel (0) target = $region17
    $region16: #{tpu_custom_call.1} parent=1 // pred_region
      %39 = dma.done [#allocation3], 6144
    $region17: #{tpu_custom_call.1} parent=1 // pred_fallthru
      _
    // Predicated region
    $region18: #{tpu_custom_call.1} parent=1 // pred_check
      _
    $region19: #{tpu_custom_call.1} parent=1 // pred_check_branch
      %41 = sbr.rel (0) target = $region21
    $region20: #{tpu_custom_call.1} parent=1 // pred_region
      %42 = dma.done [#allocation6], 512
    $region21: #{tpu_custom_call.1} parent=1 // pred_fallthru
      _
    %v44 = vld [vmem:[#allocation5] ss:$0 sm:$0xff]
    %v45 = vld [vmem:[#allocation5 + $0x1] ss:$0 sm:$0xff]
    %v46 = vld [vmem:[#allocation5 + $0x2] ss:$0 sm:$0xff]
    %v47 = vld [vmem:[#allocation5 + $0x3] ss:$0 sm:$0xff]
    %v48 = vld [vmem:[#allocation5 + $0x4] ss:$0 sm:$0xff]
    %v49 = vld [vmem:[#allocation5 + $0x5] ss:$0 sm:$0xff]
    %v50 = vld [vmem:[#allocation5 + $0x6] ss:$0 sm:$0xff]
    %v51 = vld [vmem:[#allocation5 + $0x7] ss:$0 sm:$0xff]
    %s52 = scalar_lea.vmem [#allocation5], 16
    %v53 = vld [vmem:[%s52] ss:$8 sm:$0x3]
    %v54 = vld [vmem:[#allocation5 + $0x11] ss:$0 sm:$0xff]
    %v55 = vld [vmem:[#allocation5 + $0x12] ss:$0 sm:$0xff]
    %v56 = vld [vmem:[#allocation5 + $0x13] ss:$0 sm:$0xff]
    %v57 = vld [vmem:[#allocation2] sm:$0xff]
    %v58 = vld [vmem:[#allocation2 + $0xc] sm:$0xff]
    %v59 = vld [vmem:[#allocation2 + $0x18] sm:$0xff]
    %v60 = vld [vmem:[#allocation2 + $0x24] sm:$0xff]
    %v61 = vld [vmem:[#allocation2 + $0x30] sm:$0xff]
    %v62 = vld [vmem:[#allocation2 + $0x3c] sm:$0xff]
    %v63 = vld [vmem:[#allocation2 + $0x48] sm:$0xff]
    %v64 = vld [vmem:[#allocation2 + $0x54] sm:$0xff]
    %v65 = vld [vmem:[#allocation2 + $0x60] sm:$0xff]
    %v66 = vld [vmem:[#allocation2 + $0x6c] sm:$0xff]
    %v67 = vld [vmem:[#allocation2 + $0x78] sm:$0xff]
    %v68 = vld [vmem:[#allocation2 + $0x84] sm:$0xff]
    %v69 = vld [vmem:[#allocation2 + $0x90] sm:$0xff]
    %v70 = vld [vmem:[#allocation2 + $0x9c] sm:$0xff]
    %v71 = vld [vmem:[#allocation2 + $0xa8] sm:$0xff]
    %v72 = vld [vmem:[#allocation2 + $0xb4] sm:$0xff]
    %v73 = vld [vmem:[#allocation2 + $0x8] sm:$0xf]
    %v74 = vld [vmem:[#allocation2 + $0x14] sm:$0xf]
    %v75 = vld [vmem:[#allocation2 + $0x20] sm:$0xf]
    %v76 = vld [vmem:[#allocation2 + $0x2c] sm:$0xf]
    %v77 = vld [vmem:[#allocation2 + $0x38] sm:$0xf]
    %v78 = vld [vmem:[#allocation2 + $0x44] sm:$0xf]
    %v79 = vld [vmem:[#allocation2 + $0x50] sm:$0xf]
    %v80 = vld [vmem:[#allocation2 + $0x5c] sm:$0xf]
    %v81 = vld [vmem:[#allocation2 + $0x68] sm:$0xf]
    %v82 = vld [vmem:[#allocation2 + $0x74] sm:$0xf]
    %v83 = vld [vmem:[#allocation2 + $0x80] sm:$0xf]
    %v84 = vld [vmem:[#allocation2 + $0x8c] sm:$0xf]
    %v85 = vld [vmem:[#allocation2 + $0x98] sm:$0xf]
    %v86 = vld [vmem:[#allocation2 + $0xa4] sm:$0xf]
    %v87 = vld [vmem:[#allocation2 + $0xb0] sm:$0xf]
    %v88 = vld [vmem:[#allocation2 + $0xbc] sm:$0xf]
    %v89 = vld [vmem:[#allocation2 + $0xc8] sm:$0xf]
    %v90 = vld [vmem:[#allocation2 + $0xd4] sm:$0xf]
    %v91 = vld [vmem:[#allocation2 + $0xe0] sm:$0xf]
    %v92 = vld [vmem:[#allocation2 + $0xec] sm:$0xf]
    %v93 = vld [vmem:[#allocation2 + $0xf8] sm:$0xf]
    %v94 = vld [vmem:[#allocation2 + $0x104] sm:$0xf]
    %v95 = vld [vmem:[#allocation2 + $0x110] sm:$0xf]
    %v96 = vld [vmem:[#allocation2 + $0x11c] sm:$0xf]
    %v97 = vld [vmem:[#allocation2 + $0x128] sm:$0xf]
    %v98 = vld [vmem:[#allocation2 + $0x134] sm:$0xf]
    %v99 = vld [vmem:[#allocation2 + $0x140] sm:$0xf]
    %v100 = vld [vmem:[#allocation2 + $0x14c] sm:$0xf]
    %v101 = vld [vmem:[#allocation2 + $0x158] sm:$0xf]
    %v102 = vld [vmem:[#allocation2 + $0x164] sm:$0xf]
    %v103 = vld [vmem:[#allocation2 + $0x170] sm:$0xf]
    %v104 = vld [vmem:[#allocation2 + $0x17c] sm:$0xf]
    %v105 = vld [vmem:[#allocation2 + $0xc0] sm:$0xf]
    %v106 = vld [vmem:[#allocation2 + $0xcc] sm:$0xf]
    %v107 = vld [vmem:[#allocation2 + $0xc4] sm:$0xf]
    %v108 = vld [vmem:[#allocation2 + $0xd0] sm:$0xf]
    %v109 = vld [vmem:[#allocation2 + $0xdc] sm:$0xf]
    %v110 = vld [vmem:[#allocation2 + $0xe8] sm:$0xf]
    %v111 = vld [vmem:[#allocation2 + $0xf4] sm:$0xf]
    %v112 = vld [vmem:[#allocation2 + $0x100] sm:$0xf]
    %v113 = vld [vmem:[#allocation2 + $0x10c] sm:$0xf]
    %v114 = vld [vmem:[#allocation2 + $0x118] sm:$0xf]
    %v115 = vld [vmem:[#allocation2 + $0x124] sm:$0xf]
    %v116 = vld [vmem:[#allocation2 + $0x130] sm:$0xf]
    %v117 = vld [vmem:[#allocation2 + $0x13c] sm:$0xf]
    %v118 = vld [vmem:[#allocation2 + $0x148] sm:$0xf]
    %v119 = vld [vmem:[#allocation2 + $0x154] sm:$0xf]
    %v120 = vld [vmem:[#allocation2 + $0x160] sm:$0xf]
    %v121 = vld [vmem:[#allocation2 + $0x16c] sm:$0xf]
    %v122 = vld [vmem:[#allocation2 + $0x178] sm:$0xf]
    %v123 = vld [vmem:[#allocation2 + $0xd8] sm:$0xf]
    %v124 = vld [vmem:[#allocation2 + $0xe4] sm:$0xf]
    %v125 = vld [vmem:[#allocation2 + $0xf0] sm:$0xf]
    %v126 = vld [vmem:[#allocation2 + $0xfc] sm:$0xf]
    %v127 = vld [vmem:[%s0] sm:$0xff]
    %v128 = vlog2.pop %v127
    %v129 = vmul.f32 %v128, 0.6931472
    %v130 = vmul.f32 %v129, 0.5
    %v131 = vand.u32 2147483647, %v130
    %vm132 = vcmp.le.f32.partialorder %v131, 0.7853982
    %vm133 = vcmp.lt.s32.totalorder %v130, 0
    %v134 = vand.u32 %v130, 2139095040
    %v135 = vshrl.u32 %v134, 23
    %v136 = vsub.s32 %v135, 127
    %v137 = vand.u32 2147483647, %v130
    %v138 = vand.u32 %v137, 8388607
    %v139 = vor.u32 %v138, 8388608
    %v140 = vsub.s32 0, %v139
    %v141 = vadd.s32 %v136, 1
    %vm142 = vcmp.gt.s32.totalorder %v141, 0
    %v143 = vsel %vm142, %v141, 0
    %v144 = vshrl.u32 %v143, 5
    %v145 = vand.u32 %v143, 31
    %v146 = vsub.s32 32, %v145
    %v147 = vshrl.u32 683565275, %v146
    %v148 = vshll.u32 683565275, %v145
    %v149 = vshrl.u32 2475754826, %v146
    %v150 = vor.u32 %v148, %v149
    %v151 = vshll.u32 2475754826, %v145
    %v152 = vshrl.u32 2131351028, %v146
    %v153 = vor.u32 %v151, %v152
    %v154 = vshll.u32 2131351028, %v145
    %v155 = vshrl.u32 2102212464, %v146
    %v156 = vor.u32 %v154, %v155
    %v157 = vshll.u32 2102212464, %v145
    %v158 = vshrl.u32 920167782, %v146
    %v159 = vor.u32 %v157, %v158
    %v160 = vshll.u32 920167782, %v145
    %v161 = vshrl.u32 1326507024, %v146
    %v162 = vor.u32 %v160, %v161
    %vm163 = vcmp.lt.s32.totalorder %v144, 1
    %vm164 = vcmp.lt.s32.totalorder %v144, 2
    %vm165 = vcmp.lt.s32.totalorder %v144, 3
    %vm166 = vcmp.lt.s32.totalorder %v144, 4
    %v167 = vsel %vm163, %v147, %v150
    %v168 = vsel %vm166, %v156, 2102212464
    %v169 = vsel %vm165, %v153, %v168
    %v170 = vsel %vm164, %v167, %v169
    %v171 = vsel %vm163, %v150, %v153
    %v172 = vsel %vm166, %v159, 920167782
    %v173 = vsel %vm165, %v156, %v172
    %v174 = vsel %vm164, %v171, %v173
    %v175 = vsel %vm163, %v153, %v156
    %v176 = vsel %vm166, %v162, 1326507024
    %v177 = vsel %vm165, %v159, %v176
    %v178 = vsel %vm164, %v175, %v177
    %v179 = vshll.u32 %v139, 8
    %v180 = vmul.u32.u64.compose %v179, %v178
    %v181 = vextract.low.u32 %v180
    %v182 = vextract.high.u32 %v180
    %v183 = vmul.u32.u64.compose %v179, %v174
    %v184 = vextract.low.u32 %v183
    %v185 = vextract.high.u32 %v183
    %v186 = vmul.u32 %v179, %v170
    %v187 = vadd.s32 %v182, %v184
    %vm188 = vc.u32 %v182, %v184
    %v189 = vadd.s32 %v185, 1
    %v190 = vsel %vm188, %v189, %v185
    %v191 = vadd.s32 %v186, %v190
    %v192 = vadd.s32 %v191, 536870912
    %v193 = vshrl.u32 %v192, 30
    %v194 = vshll.u32 %v193, 30
    %v195 = vsub.s32 %v191, %v194
    %vm196 = vcmp.lt.s32.totalorder %v195, 0
    %v197 = vsub.s32 0, %v195
    %v198 = vsel %vm196, %v197, %v195
    %v199 = vclz %v198
    %v200 = vsub.s32 %v199, 2
    %vm201 = vcmp.gt.s32.totalorder 0, %v200
    %v202 = vsel %vm201, 0, %v200
    %v203 = vsub.s32 32, %v202
    %v204 = vshll.u32 %v195, %v202
    %v205 = vshrl.u32 %v187, %v203
    %v206 = vor.u32 %v204, %v205
    %v207 = vsub.s32 4294967266, %v202
    %v208 = vadd.s32 %v207, 127
    %v209 = vshll.u32 %v208, 23
    %v210 = vor.u32 4788187, %v209
    %v211 = vand.u32 2147483647, %v210
    %v213 = vcvt.s32.f32 %v206
    %v214 = vmul.f32 %v213, %v211
    %v215 = vxor.u32 %v214, 2147483648
    %v216 = vsel %vm133, %v215, %v214
    %v217 = vsub.s32 4, %v193
    %v218 = vsel %vm133, %v217, %v193
    %v219 = vsel %vm132, %v130, %v216
    %v220 = vsel %vm132, 0, %v218
    %v221 = vcosq.f32.pop %v219
    %v222 = vsinq.f32.pop %v219
    %vm223 = vweird.f32 %v130
    %v224 = vadd.s32 %v220, 3
    %v225 = vand.u32 %v224, 3
    %vm226 = vcmp.lt.s32.totalorder %v225, 2
    %vm227 = vcmp.eq.s32.totalorder %v225, 0
    %v228 = vxor.u32 %v222, 2147483648
    %v229 = vsel %vm227, %v221, %v228
    %vm230 = vcmp.eq.s32.totalorder %v225, 2
    %v231 = vxor.u32 %v221, 2147483648
    %v232 = vsel %vm230, %v231, %v222
    %v233 = vsel %vm226, %v229, %v232
    %v234 = vsel %vm223, nan, %v233
    %v235 = vand.u32 2147483647, %v130
    %vm236 = vcmp.le.f32.partialorder %v235, 0.7853982
    %vm237 = vcmp.lt.s32.totalorder %v130, 0
    %v238 = vand.u32 %v130, 2139095040
    %v239 = vshrl.u32 %v238, 23
    %v240 = vsub.s32 %v239, 127
    %v241 = vand.u32 2147483647, %v130
    %v242 = vand.u32 %v241, 8388607
    %v243 = vor.u32 %v242, 8388608
    %v244 = vsub.s32 0, %v243
    %v245 = vadd.s32 %v240, 1
    %vm246 = vcmp.gt.s32.totalorder %v245, 0
    %v247 = vsel %vm246, %v245, 0
    %v248 = vshrl.u32 %v247, 5
    %v249 = vand.u32 %v247, 31
    %v250 = vsub.s32 32, %v249
    %v251 = vshrl.u32 683565275, %v250
    %v252 = vshll.u32 683565275, %v249
    %v253 = vshrl.u32 2475754826, %v250
    %v254 = vor.u32 %v252, %v253
    %v255 = vshll.u32 2475754826, %v249
    %v256 = vshrl.u32 2131351028, %v250
    %v257 = vor.u32 %v255, %v256
    %v258 = vshll.u32 2131351028, %v249
    %v259 = vshrl.u32 2102212464, %v250
    %v260 = vor.u32 %v258, %v259
    %v261 = vshll.u32 2102212464, %v249
    %v262 = vshrl.u32 920167782, %v250
    %v263 = vor.u32 %v261, %v262
    %v264 = vshll.u32 920167782, %v249
    %v265 = vshrl.u32 1326507024, %v250
    %v266 = vor.u32 %v264, %v265
    %vm267 = vcmp.lt.s32.totalorder %v248, 1
    %vm268 = vcmp.lt.s32.totalorder %v248, 2
    %vm269 = vcmp.lt.s32.totalorder %v248, 3
    %vm270 = vcmp.lt.s32.totalorder %v248, 4
    %v271 = vsel %vm267, %v251, %v254
    %v272 = vsel %vm270, %v260, 2102212464
    %v273 = vsel %vm269, %v257, %v272
    %v274 = vsel %vm268, %v271, %v273
    %v275 = vsel %vm267, %v254, %v257
    %v276 = vsel %vm270, %v263, 920167782
    %v277 = vsel %vm269, %v260, %v276
    %v278 = vsel %vm268, %v275, %v277
    %v279 = vsel %vm267, %v257, %v260
    %v280 = vsel %vm270, %v266, 1326507024
    %v281 = vsel %vm269, %v263, %v280
    %v282 = vsel %vm268, %v279, %v281
    %v283 = vshll.u32 %v243, 8
    %v284 = vmul.u32.u64.compose %v283, %v282
    %v285 = vextract.low.u32 %v284
    %v286 = vextract.high.u32 %v284
    %v287 = vmul.u32.u64.compose %v283, %v278
    %v288 = vextract.low.u32 %v287
    %v289 = vextract.high.u32 %v287
    %v290 = vmul.u32 %v283, %v274
    %v291 = vadd.s32 %v286, %v288
    %vm292 = vc.u32 %v286, %v288
    %v293 = vadd.s32 %v289, 1
    %v294 = vsel %vm292, %v293, %v289
    %v295 = vadd.s32 %v290, %v294
    %v296 = vadd.s32 %v295, 536870912
    %v297 = vshrl.u32 %v296, 30
    %v298 = vshll.u32 %v297, 30
    %v299 = vsub.s32 %v295, %v298
    %vm300 = vcmp.lt.s32.totalorder %v299, 0
    %v301 = vsub.s32 0, %v299
    %v302 = vsel %vm300, %v301, %v299
    %v303 = vclz %v302
    %v304 = vsub.s32 %v303, 2
    %vm305 = vcmp.gt.s32.totalorder 0, %v304
    %v306 = vsel %vm305, 0, %v304
    %v307 = vsub.s32 32, %v306
    %v308 = vshll.u32 %v299, %v306
    %v309 = vshrl.u32 %v291, %v307
    %v310 = vor.u32 %v308, %v309
    %v311 = vsub.s32 4294967266, %v306
    %v312 = vadd.s32 %v311, 127
    %v313 = vshll.u32 %v312, 23
    %v314 = vor.u32 4788187, %v313
    %v315 = vand.u32 2147483647, %v314
    %v317 = vcvt.s32.f32 %v310
    %v318 = vmul.f32 %v317, %v315
    %v319 = vxor.u32 %v318, 2147483648
    %v320 = vsel %vm237, %v319, %v318
    %v321 = vsub.s32 4, %v297
    %v322 = vsel %vm237, %v321, %v297
    %v323 = vsel %vm236, %v130, %v320
    %v324 = vsel %vm236, 0, %v322
    %v325 = vcosq.f32.pop %v323
    %v326 = vsinq.f32.pop %v323
    %vm327 = vweird.f32 %v130
    %v328 = vand.u32 %v324, 3
    %vm329 = vcmp.lt.s32.totalorder %v328, 2
    %vm330 = vcmp.eq.s32.totalorder %v328, 0
    %v331 = vxor.u32 %v326, 2147483648
    %v332 = vsel %vm330, %v325, %v331
    %vm333 = vcmp.eq.s32.totalorder %v328, 2
    %v334 = vxor.u32 %v325, 2147483648
    %v335 = vsel %vm333, %v334, %v326
    %v336 = vsel %vm329, %v332, %v335
    %v337 = vsel %vm327, nan, %v336
    %339 = vset.pattern.permute.xlu0 3
    %340 = vperm.xlu0 %339, %v127
    %v341 = vpop.permute.xlu0 %340
    %v343 = vmul.f32 %v341, %v44
    %v344 = vadd.f32 %v343, %v49
    %345 = vset.pattern.permute.xlu0 4
    %346 = vperm.xlu0 %345, %v127
    %v347 = vpop.permute.xlu0 %346
    %v349 = vmul.f32 %v344, %v347
    %350 = vset.pattern.permute.xlu0 0
    %351 = vperm.xlu0 %350, %v127
    %v352 = vpop.permute.xlu0 %351
    %v354 = vmul.f32 %v352, %v45
    %355 = vset.pattern.permute.xlu0 1
    %356 = vperm.xlu0 %355, %v127
    %v357 = vpop.permute.xlu0 %356
    %v359 = vmul.f32 %v357, %v46
    %v360 = vadd.f32 %v354, %v359
    %362 = vset.pattern.permute.xlu0 2
    %363 = vperm.xlu0 %362, %v234
    %v364 = vpop.permute.xlu0 %363
    %v366 = vmul.f32 %v364, %v47
    %v367 = vadd.f32 %v360, %v366
    %369 = vset.pattern.permute.xlu0 2
    %370 = vperm.xlu0 %369, %v337
    %v371 = vpop.permute.xlu0 %370
    %v373 = vmul.f32 %v371, %v48
    %v374 = vadd.f32 %v367, %v373
    %v375 = vpack.c.bf16 %v349, %v349
    %v378 = vunpack.c.l.b16 %v123
    %v379 = vunpack.c.l.b16 %v124
    %v380 = vpack.c.b16 %v379, %v378
    %vm382 = vcmask 130048
    %v384 = vsel %vm382, %v375, 0
    %386 = vmatprep.subr.bf16.mxu0 0
    %387 = vmatpush1.bf16.msra.mxu0 %v380
    %388 = vmatprep.subr.bf16.mxu0 0
    %389 = vmatpush1.bf16.msra.mxu0 0
    %390 = vmatprep.subr.bf16.mxu0 0
    %391 = vmatpush1.bf16.msra.mxu0 0
    %392 = vmatprep.subr.bf16.mxu0 0
    %393 = vmatpush1.bf16.msra.mxu0 0
    %394 = vmatprep.subr.bf16.mxu0 0
    %395 = vmatpush1.bf16.msra.mxu0 0
    %396 = vmatprep.subr.bf16.mxu0 0
    %397 = vmatpush1.bf16.msra.mxu0 0
    %398 = vmatprep.subr.bf16.mxu0 0
    %399 = vmatpush1.bf16.msra.mxu0 0
    %400 = vmatprep.subr.bf16.mxu0 0
    %401 = vmatpush1.bf16.msra.mxu0 0
    %402 = vmatprep.subr.bf16.mxu0 0
    %403 = vmatpush1.bf16.msra.mxu0 0
    %404 = vmatprep.subr.bf16.mxu0 0
    %405 = vmatpush1.bf16.msra.mxu0 0
    %406 = vmatprep.subr.bf16.mxu0 0
    %407 = vmatpush1.bf16.msra.mxu0 0
    %408 = vmatprep.subr.bf16.mxu0 0
    %409 = vmatpush1.bf16.msra.mxu0 0
    %410 = vmatprep.subr.bf16.mxu0 0
    %411 = vmatpush1.bf16.msra.mxu0 0
    %412 = vmatprep.subr.bf16.mxu0 0
    %413 = vmatpush1.bf16.msra.mxu0 0
    %414 = vmatprep.subr.bf16.mxu0 0
    %415 = vmatpush1.bf16.msra.mxu0 0
    %416 = vmatprep.subr.bf16.mxu0 0
    %417 = vmatpush1.bf16.msra.mxu0 0
    %418 = vmatprep.mubr.bf16.mxu0 0
    %419 = vmatmul.mubr.bf16.gmra.mrb[0].mxu0 %v384
    %v420 = vpop.f32.mrb[0].mxu0
    %v421 = vadd.f32 0.0, %v420
    %v422 = vpop.f32.mrb[0].mxu0
    %v423 = vpop.f32.mrb[0].mxu0
    %v424 = vpop.f32.mrb[0].mxu0
    %425 = vdwg.mxu0
    %v426 = vadd.f32 %v374, %v421
    %v427 = vadd.f32 %v426, %v50
    %v428 = vmul.f32 %v427, 0.70710677
    %v429 = vand.u32 2147483647, %v428
    %v430 = vmul.f32 %v429, 0.3275911
    %v431 = vadd.f32 %v430, 1.0
    %v432 = vrcp.pop %v431
    %v433 = vmul.f32 1.0, %v432
    %v434 = vmul.f32 %v433, 1.0614054
    %v435 = vadd.f32 %v434, -1.4531521
    %v436 = vmul.f32 %v433, %v435
    %v437 = vadd.f32 %v436, 1.4214138
    %v438 = vmul.f32 %v433, %v437
    %v439 = vadd.f32 %v438, -0.28449672
    %v440 = vmul.f32 %v433, %v439
    %v441 = vadd.f32 %v440, 0.2548296
    %v442 = vmul.f32 %v433, %v441
    %v443 = vmul.f32 %v429, %v429
    %v444 = vsub.f32 0.0, %v443
    %v445 = vmul.f32 %v444, 1.442695
    %v446 = vpow.pop %v445
    %v447 = vmul.f32 %v442, %v446
    %v448 = vsub.f32 1.0, %v447
    %vm449 = vcmp.lt.f32.partialorder %v428, 0.0
    %v450 = vsub.f32 0.0, %v448
    %v451 = vsel %vm449, %v450, %v448
    %v452 = vmul.f32 %v427, 0.5
    %v453 = vadd.f32 %v451, 1.0
    %v454 = vmul.f32 %v452, %v453
    %v455 = vpack.c.bf16 %v454, %v454
    %v458 = vunpack.c.l.b16 %v105
    %v459 = vunpack.c.l.b16 %v106
    %v460 = vpack.c.b16 %v459, %v458
    %v463 = vsel %vm382, %v455, 0
    %465 = vmatprep.subr.bf16.mxu0 0
    %466 = vmatpush1.bf16.msra.mxu0 %v460
    %467 = vmatprep.subr.bf16.mxu0 0
    %468 = vmatpush1.bf16.msra.mxu0 0
    %469 = vmatprep.subr.bf16.mxu0 0
    %470 = vmatpush1.bf16.msra.mxu0 0
    %471 = vmatprep.subr.bf16.mxu0 0
    %472 = vmatpush1.bf16.msra.mxu0 0
    %473 = vmatprep.subr.bf16.mxu0 0
    %474 = vmatpush1.bf16.msra.mxu0 0
    %475 = vmatprep.subr.bf16.mxu0 0
    %476 = vmatpush1.bf16.msra.mxu0 0
    %477 = vmatprep.subr.bf16.mxu0 0
    %478 = vmatpush1.bf16.msra.mxu0 0
    %479 = vmatprep.subr.bf16.mxu0 0
    %480 = vmatpush1.bf16.msra.mxu0 0
    %481 = vmatprep.subr.bf16.mxu0 0
    %482 = vmatpush1.bf16.msra.mxu0 0
    %483 = vmatprep.subr.bf16.mxu0 0
    %484 = vmatpush1.bf16.msra.mxu0 0
    %485 = vmatprep.subr.bf16.mxu0 0
    %486 = vmatpush1.bf16.msra.mxu0 0
    %487 = vmatprep.subr.bf16.mxu0 0
    %488 = vmatpush1.bf16.msra.mxu0 0
    %489 = vmatprep.subr.bf16.mxu0 0
    %490 = vmatpush1.bf16.msra.mxu0 0
    %491 = vmatprep.subr.bf16.mxu0 0
    %492 = vmatpush1.bf16.msra.mxu0 0
    %493 = vmatprep.subr.bf16.mxu0 0
    %494 = vmatpush1.bf16.msra.mxu0 0
    %495 = vmatprep.subr.bf16.mxu0 0
    %496 = vmatpush1.bf16.msra.mxu0 0
    %497 = vmatprep.mubr.bf16.mxu0 0
    %498 = vmatmul.mubr.bf16.gmra.mrb[0].mxu0 %v463
    %v499 = vpop.f32.mrb[0].mxu0
    %v500 = vadd.f32 %v51, %v499
    %v501 = vpop.f32.mrb[0].mxu0
    %v502 = vpop.f32.mrb[0].mxu0
    %v503 = vpop.f32.mrb[0].mxu0
    %504 = vdwg.mxu0
    %v505 = vmul.f32 %v500, 0.70710677
    %v506 = vand.u32 2147483647, %v505
    %v507 = vmul.f32 %v506, 0.3275911
    %v508 = vadd.f32 %v507, 1.0
    %v509 = vrcp.pop %v508
    %v510 = vmul.f32 1.0, %v509
    %v511 = vmul.f32 %v510, 1.0614054
    %v512 = vadd.f32 %v511, -1.4531521
    %v513 = vmul.f32 %v510, %v512
    %v514 = vadd.f32 %v513, 1.4214138
    %v515 = vmul.f32 %v510, %v514
    %v516 = vadd.f32 %v515, -0.28449672
    %v517 = vmul.f32 %v510, %v516
    %v518 = vadd.f32 %v517, 0.2548296
    %v519 = vmul.f32 %v510, %v518
    %v520 = vmul.f32 %v506, %v506
    %v521 = vsub.f32 0.0, %v520
    %v522 = vmul.f32 %v521, 1.442695
    %v523 = vpow.pop %v522
    %v524 = vmul.f32 %v519, %v523
    %v525 = vsub.f32 1.0, %v524
    %vm526 = vcmp.lt.f32.partialorder %v505, 0.0
    %v527 = vsub.f32 0.0, %v525
    %v528 = vsel %vm526, %v527, %v525
    %v529 = vmul.f32 %v500, 0.5
    %v530 = vadd.f32 %v528, 1.0
    %v531 = vmul.f32 %v529, %v530
    %v532 = vpack.c.bf16 %v531, %v531
    %v534 = vlaneseq
    %v535 = vshrl.u32 %v534, 7
    %v536 = vsub.s32 0, %v535
    %v537 = vrot.slane %v53, %v536
    %v538 = vlaneseq
    %v539 = vshrl.u32 %v538, 7
    %v540 = vsub.s32 1, %v539
    %v541 = vrot.slane %v53, %v540
    %v560 = vunpack.c.l.b16 %v57
    %v561 = vunpack.c.h.b16 %v57
    %v562 = vunpack.c.l.b16 %v58
    %v563 = vunpack.c.h.b16 %v58
    %v564 = vunpack.c.l.b16 %v59
    %v565 = vunpack.c.h.b16 %v59
    %v566 = vunpack.c.l.b16 %v60
    %v567 = vunpack.c.h.b16 %v60
    %v568 = vunpack.c.l.b16 %v61
    %v569 = vunpack.c.h.b16 %v61
    %v570 = vunpack.c.l.b16 %v62
    %v571 = vunpack.c.h.b16 %v62
    %v572 = vunpack.c.l.b16 %v63
    %v573 = vunpack.c.h.b16 %v63
    %v574 = vunpack.c.l.b16 %v64
    %v575 = vunpack.c.h.b16 %v64
    %v576 = vunpack.c.l.b16 %v65
    %v577 = vunpack.c.h.b16 %v65
    %v578 = vunpack.c.l.b16 %v66
    %v579 = vunpack.c.h.b16 %v66
    %v580 = vunpack.c.l.b16 %v67
    %v581 = vunpack.c.h.b16 %v67
    %v582 = vunpack.c.l.b16 %v68
    %v583 = vunpack.c.h.b16 %v68
    %v584 = vunpack.c.l.b16 %v69
    %v585 = vunpack.c.h.b16 %v69
    %v586 = vunpack.c.l.b16 %v70
    %v587 = vunpack.c.h.b16 %v70
    %v588 = vunpack.c.l.b16 %v71
    %v589 = vunpack.c.h.b16 %v71
    %v590 = vunpack.c.l.b16 %v72
    %v591 = vunpack.c.h.b16 %v72
    %v592 = vpack.c.b16 %v562, %v560
    %v593 = vpack.c.b16 %v563, %v561
    %v594 = vpack.c.b16 %v566, %v564
    %v595 = vpack.c.b16 %v567, %v565
    %v596 = vpack.c.b16 %v570, %v568
    %v597 = vpack.c.b16 %v571, %v569
    %v598 = vpack.c.b16 %v574, %v572
    %v599 = vpack.c.b16 %v575, %v573
    %v600 = vpack.c.b16 %v578, %v576
    %v601 = vpack.c.b16 %v579, %v577
    %v602 = vpack.c.b16 %v582, %v580
    %v603 = vpack.c.b16 %v583, %v581
    %v604 = vpack.c.b16 %v586, %v584
    %v605 = vpack.c.b16 %v587, %v585
    %v606 = vpack.c.b16 %v590, %v588
    %v607 = vpack.c.b16 %v591, %v589
    %624 = vmatprep.subr.bf16.mxu0 %v593
    %625 = vmatpush1.bf16.msra.mxu0 %v592
    %626 = vmatprep.subr.bf16.mxu0 %v595
    %627 = vmatpush1.bf16.msra.mxu0 %v594
    %628 = vmatprep.subr.bf16.mxu0 %v597
    %629 = vmatpush1.bf16.msra.mxu0 %v596
    %630 = vmatprep.subr.bf16.mxu0 %v599
    %631 = vmatpush1.bf16.msra.mxu0 %v598
    %632 = vmatprep.subr.bf16.mxu0 %v601
    %633 = vmatpush1.bf16.msra.mxu0 %v600
    %634 = vmatprep.subr.bf16.mxu0 %v603
    %635 = vmatpush1.bf16.msra.mxu0 %v602
    %636 = vmatprep.subr.bf16.mxu0 %v605
    %637 = vmatpush1.bf16.msra.mxu0 %v604
    %638 = vmatprep.subr.bf16.mxu0 %v607
    %639 = vmatpush1.bf16.msra.mxu0 %v606
    %640 = vmatprep.subr.bf16.mxu0 0
    %641 = vmatpush1.bf16.msra.mxu0 0
    %642 = vmatprep.subr.bf16.mxu0 0
    %643 = vmatpush1.bf16.msra.mxu0 0
    %644 = vmatprep.subr.bf16.mxu0 0
    %645 = vmatpush1.bf16.msra.mxu0 0
    %646 = vmatprep.subr.bf16.mxu0 0
    %647 = vmatpush1.bf16.msra.mxu0 0
    %648 = vmatprep.subr.bf16.mxu0 0
    %649 = vmatpush1.bf16.msra.mxu0 0
    %650 = vmatprep.subr.bf16.mxu0 0
    %651 = vmatpush1.bf16.msra.mxu0 0
    %652 = vmatprep.subr.bf16.mxu0 0
    %653 = vmatpush1.bf16.msra.mxu0 0
    %654 = vmatprep.subr.bf16.mxu0 0
    %655 = vmatpush1.bf16.msra.mxu0 0
    %656 = vmatprep.mubr.bf16.mxu0 0
    %657 = vmatmul.mubr.bf16.gmra.mrb[0].mxu0 %v532
    %v658 = vpop.f32.mrb[0].mxu0
    %v659 = vadd.f32 %v537, %v658
    %v660 = vpop.f32.mrb[0].mxu0
    %v661 = vadd.f32 %v541, %v660
    %v662 = vpop.f32.mrb[0].mxu0
    %v663 = vpop.f32.mrb[0].mxu0
    %664 = vdwg.mxu0
    %v665 = vmul.f32 %v659, 0.70710677
    %v666 = vmul.f32 %v661, 0.70710677
    %v667 = vand.u32 2147483647, %v665
    %v668 = vand.u32 2147483647, %v666
    %v669 = vmul.f32 %v667, 0.3275911
    %v670 = vmul.f32 %v668, 0.3275911
    %v671 = vadd.f32 %v669, 1.0
    %v672 = vadd.f32 %v670, 1.0
    %v673 = vrcp.pop %v671
    %v674 = vmul.f32 1.0, %v673
    %v675 = vrcp.pop %v672
    %v676 = vmul.f32 1.0, %v675
    %v677 = vmul.f32 %v674, 1.0614054
    %v678 = vmul.f32 %v676, 1.0614054
    %v679 = vadd.f32 %v677, -1.4531521
    %v680 = vadd.f32 %v678, -1.4531521
    %v681 = vmul.f32 %v674, %v679
    %v682 = vmul.f32 %v676, %v680
    %v683 = vadd.f32 %v681, 1.4214138
    %v684 = vadd.f32 %v682, 1.4214138
    %v685 = vmul.f32 %v674, %v683
    %v686 = vmul.f32 %v676, %v684
    %v687 = vadd.f32 %v685, -0.28449672
    %v688 = vadd.f32 %v686, -0.28449672
    %v689 = vmul.f32 %v674, %v687
    %v690 = vmul.f32 %v676, %v688
    %v691 = vadd.f32 %v689, 0.2548296
    %v692 = vadd.f32 %v690, 0.2548296
    %v693 = vmul.f32 %v674, %v691
    %v694 = vmul.f32 %v676, %v692
    %v695 = vmul.f32 %v667, %v667
    %v696 = vmul.f32 %v668, %v668
    %v697 = vsub.f32 0.0, %v695
    %v698 = vsub.f32 0.0, %v696
    %v699 = vmul.f32 %v697, 1.442695
    %v700 = vpow.pop %v699
    %v701 = vmul.f32 %v698, 1.442695
    %v702 = vpow.pop %v701
    %v703 = vmul.f32 %v693, %v700
    %v704 = vmul.f32 %v694, %v702
    %v705 = vsub.f32 1.0, %v703
    %v706 = vsub.f32 1.0, %v704
    %vm707 = vcmp.lt.f32.partialorder %v665, 0.0
    %vm708 = vcmp.lt.f32.partialorder %v666, 0.0
    %v709 = vsub.f32 0.0, %v705
    %v710 = vsub.f32 0.0, %v706
    %v711 = vsel %vm707, %v709, %v705
    %v712 = vsel %vm708, %v710, %v706
    %v713 = vmul.f32 %v659, 0.5
    %v714 = vmul.f32 %v661, 0.5
    %v715 = vadd.f32 %v711, 1.0
    %v716 = vadd.f32 %v712, 1.0
    %v717 = vmul.f32 %v713, %v715
    %v718 = vmul.f32 %v714, %v716
    %v719 = vpack.c.bf16 %v717, %v717
    %v720 = vpack.c.bf16 %v718, %v718
    %v753 = vunpack.c.l.b16 %v73
    %v754 = vunpack.c.l.b16 %v74
    %v755 = vunpack.c.l.b16 %v75
    %v756 = vunpack.c.l.b16 %v76
    %v757 = vunpack.c.l.b16 %v77
    %v758 = vunpack.c.l.b16 %v78
    %v759 = vunpack.c.l.b16 %v79
    %v760 = vunpack.c.l.b16 %v80
    %v761 = vunpack.c.l.b16 %v81
    %v762 = vunpack.c.l.b16 %v82
    %v763 = vunpack.c.l.b16 %v83
    %v764 = vunpack.c.l.b16 %v84
    %v765 = vunpack.c.l.b16 %v85
    %v766 = vunpack.c.l.b16 %v86
    %v767 = vunpack.c.l.b16 %v87
    %v768 = vunpack.c.l.b16 %v88
    %v769 = vunpack.c.l.b16 %v89
    %v770 = vunpack.c.l.b16 %v90
    %v771 = vunpack.c.l.b16 %v91
    %v772 = vunpack.c.l.b16 %v92
    %v773 = vunpack.c.l.b16 %v93
    %v774 = vunpack.c.l.b16 %v94
    %v775 = vunpack.c.l.b16 %v95
    %v776 = vunpack.c.l.b16 %v96
    %v777 = vunpack.c.l.b16 %v97
    %v778 = vunpack.c.l.b16 %v98
    %v779 = vunpack.c.l.b16 %v99
    %v780 = vunpack.c.l.b16 %v100
    %v781 = vunpack.c.l.b16 %v101
    %v782 = vunpack.c.l.b16 %v102
    %v783 = vunpack.c.l.b16 %v103
    %v784 = vunpack.c.l.b16 %v104
    %v785 = vpack.c.b16 %v754, %v753
    %v786 = vpack.c.b16 %v756, %v755
    %v787 = vpack.c.b16 %v758, %v757
    %v788 = vpack.c.b16 %v760, %v759
    %v789 = vpack.c.b16 %v762, %v761
    %v790 = vpack.c.b16 %v764, %v763
    %v791 = vpack.c.b16 %v766, %v765
    %v792 = vpack.c.b16 %v768, %v767
    %v793 = vpack.c.b16 %v770, %v769
    %v794 = vpack.c.b16 %v772, %v771
    %v795 = vpack.c.b16 %v774, %v773
    %v796 = vpack.c.b16 %v776, %v775
    %v797 = vpack.c.b16 %v778, %v777
    %v798 = vpack.c.b16 %v780, %v779
    %v799 = vpack.c.b16 %v782, %v781
    %v800 = vpack.c.b16 %v784, %v783
    %817 = vmatprep.subr.bf16.mxu0 0
    %818 = vmatpush1.bf16.msra.mxu0 %v785
    %819 = vmatprep.subr.bf16.mxu0 0
    %820 = vmatpush1.bf16.msra.mxu0 %v786
    %821 = vmatprep.subr.bf16.mxu0 0
    %822 = vmatpush1.bf16.msra.mxu0 %v787
    %823 = vmatprep.subr.bf16.mxu0 0
    %824 = vmatpush1.bf16.msra.mxu0 %v788
    %825 = vmatprep.subr.bf16.mxu0 0
    %826 = vmatpush1.bf16.msra.mxu0 %v789
    %827 = vmatprep.subr.bf16.mxu0 0
    %828 = vmatpush1.bf16.msra.mxu0 %v790
    %829 = vmatprep.subr.bf16.mxu0 0
    %830 = vmatpush1.bf16.msra.mxu0 %v791
    %831 = vmatprep.subr.bf16.mxu0 0
    %832 = vmatpush1.bf16.msra.mxu0 %v792
    %833 = vmatprep.subr.bf16.mxu0 0
    %834 = vmatpush1.bf16.msra.mxu0 %v793
    %835 = vmatprep.subr.bf16.mxu0 0
    %836 = vmatpush1.bf16.msra.mxu0 %v794
    %837 = vmatprep.subr.bf16.mxu0 0
    %838 = vmatpush1.bf16.msra.mxu0 %v795
    %839 = vmatprep.subr.bf16.mxu0 0
    %840 = vmatpush1.bf16.msra.mxu0 %v796
    %841 = vmatprep.subr.bf16.mxu0 0
    %842 = vmatpush1.bf16.msra.mxu0 %v797
    %843 = vmatprep.subr.bf16.mxu0 0
    %844 = vmatpush1.bf16.msra.mxu0 %v798
    %845 = vmatprep.subr.bf16.mxu0 0
    %846 = vmatpush1.bf16.msra.mxu0 %v799
    %847 = vmatprep.subr.bf16.mxu0 0
    %848 = vmatpush1.bf16.msra.mxu0 %v800
    %849 = vmatprep.mubr.bf16.mxu0 %v720
    %850 = vmatmul.mubr.bf16.gmra.mrb[0].mxu0 %v719
    %v851 = vpop.f32.mrb[0].mxu0
    %v852 = vadd.f32 %v54, %v851
    %v853 = vpop.f32.mrb[0].mxu0
    %v854 = vpop.f32.mrb[0].mxu0
    %v855 = vpop.f32.mrb[0].mxu0
    %856 = vdwg.mxu0
    %v857 = vmul.f32 %v852, 0.70710677
    %v858 = vand.u32 2147483647, %v857
    %v859 = vmul.f32 %v858, 0.3275911
    %v860 = vadd.f32 %v859, 1.0
    %v861 = vrcp.pop %v860
    %v862 = vmul.f32 1.0, %v861
    %v863 = vmul.f32 %v862, 1.0614054
    %v864 = vadd.f32 %v863, -1.4531521
    %v865 = vmul.f32 %v862, %v864
    %v866 = vadd.f32 %v865, 1.4214138
    %v867 = vmul.f32 %v862, %v866
    %v868 = vadd.f32 %v867, -0.28449672
    %v869 = vmul.f32 %v862, %v868
    %v870 = vadd.f32 %v869, 0.2548296
    %v871 = vmul.f32 %v862, %v870
    %v872 = vmul.f32 %v858, %v858
    %v873 = vsub.f32 0.0, %v872
    %v874 = vmul.f32 %v873, 1.442695
    %v875 = vpow.pop %v874
    %v876 = vmul.f32 %v871, %v875
    %v877 = vsub.f32 1.0, %v876
    %vm878 = vcmp.lt.f32.partialorder %v857, 0.0
    %v879 = vsub.f32 0.0, %v877
    %v880 = vsel %vm878, %v879, %v877
    %v881 = vmul.f32 %v852, 0.5
    %v882 = vadd.f32 %v880, 1.0
    %v883 = vmul.f32 %v881, %v882
    %v884 = vpack.c.bf16 %v883, %v883
    %v901 = vunpack.c.l.b16 %v107
    %v902 = vunpack.c.l.b16 %v108
    %v903 = vunpack.c.l.b16 %v109
    %v904 = vunpack.c.l.b16 %v110
    %v905 = vunpack.c.l.b16 %v111
    %v906 = vunpack.c.l.b16 %v112
    %v907 = vunpack.c.l.b16 %v113
    %v908 = vunpack.c.l.b16 %v114
    %v909 = vunpack.c.l.b16 %v115
    %v910 = vunpack.c.l.b16 %v116
    %v911 = vunpack.c.l.b16 %v117
    %v912 = vunpack.c.l.b16 %v118
    %v913 = vunpack.c.l.b16 %v119
    %v914 = vunpack.c.l.b16 %v120
    %v915 = vunpack.c.l.b16 %v121
    %v916 = vunpack.c.l.b16 %v122
    %v917 = vpack.c.b16 %v902, %v901
    %v918 = vpack.c.b16 %v904, %v903
    %v919 = vpack.c.b16 %v906, %v905
    %v920 = vpack.c.b16 %v908, %v907
    %v921 = vpack.c.b16 %v910, %v909
    %v922 = vpack.c.b16 %v912, %v911
    %v923 = vpack.c.b16 %v914, %v913
    %v924 = vpack.c.b16 %v916, %v915
    %933 = vmatprep.subr.bf16.mxu0 0
    %934 = vmatpush1.bf16.msra.mxu0 %v917
    %935 = vmatprep.subr.bf16.mxu0 0
    %936 = vmatpush1.bf16.msra.mxu0 %v918
    %937 = vmatprep.subr.bf16.mxu0 0
    %938 = vmatpush1.bf16.msra.mxu0 %v919
    %939 = vmatprep.subr.bf16.mxu0 0
    %940 = vmatpush1.bf16.msra.mxu0 %v920
    %941 = vmatprep.subr.bf16.mxu0 0
    %942 = vmatpush1.bf16.msra.mxu0 %v921
    %943 = vmatprep.subr.bf16.mxu0 0
    %944 = vmatpush1.bf16.msra.mxu0 %v922
    %945 = vmatprep.subr.bf16.mxu0 0
    %946 = vmatpush1.bf16.msra.mxu0 %v923
    %947 = vmatprep.subr.bf16.mxu0 0
    %948 = vmatpush1.bf16.msra.mxu0 %v924
    %949 = vmatprep.subr.bf16.mxu0 0
    %950 = vmatpush1.bf16.msra.mxu0 0
    %951 = vmatprep.subr.bf16.mxu0 0
    %952 = vmatpush1.bf16.msra.mxu0 0
    %953 = vmatprep.subr.bf16.mxu0 0
    %954 = vmatpush1.bf16.msra.mxu0 0
    %955 = vmatprep.subr.bf16.mxu0 0
    %956 = vmatpush1.bf16.msra.mxu0 0
    %957 = vmatprep.subr.bf16.mxu0 0
    %958 = vmatpush1.bf16.msra.mxu0 0
    %959 = vmatprep.subr.bf16.mxu0 0
    %960 = vmatpush1.bf16.msra.mxu0 0
    %961 = vmatprep.subr.bf16.mxu0 0
    %962 = vmatpush1.bf16.msra.mxu0 0
    %963 = vmatprep.subr.bf16.mxu0 0
    %964 = vmatpush1.bf16.msra.mxu0 0
    %965 = vmatprep.mubr.bf16.mxu0 0
    %966 = vmatmul.mubr.bf16.gmra.mrb[0].mxu0 %v884
    %v967 = vpop.f32.mrb[0].mxu0
    %v968 = vadd.f32 %v55, %v967
    %v969 = vpop.f32.mrb[0].mxu0
    %v970 = vpop.f32.mrb[0].mxu0
    %v971 = vpop.f32.mrb[0].mxu0
    %972 = vdwg.mxu0
    %v973 = vmul.f32 %v968, 0.70710677
    %v974 = vand.u32 2147483647, %v973
    %v975 = vmul.f32 %v974, 0.3275911
    %v976 = vadd.f32 %v975, 1.0
    %v977 = vrcp.pop %v976
    %v978 = vmul.f32 1.0, %v977
    %v979 = vmul.f32 %v978, 1.0614054
    %v980 = vadd.f32 %v979, -1.4531521
    %v981 = vmul.f32 %v978, %v980
    %v982 = vadd.f32 %v981, 1.4214138
    %v983 = vmul.f32 %v978, %v982
    %v984 = vadd.f32 %v983, -0.28449672
    %v985 = vmul.f32 %v978, %v984
    %v986 = vadd.f32 %v985, 0.2548296
    %v987 = vmul.f32 %v978, %v986
    %v988 = vmul.f32 %v974, %v974
    %v989 = vsub.f32 0.0, %v988
    %v990 = vmul.f32 %v989, 1.442695
    %v991 = vpow.pop %v990
    %v992 = vmul.f32 %v987, %v991
    %v993 = vsub.f32 1.0, %v992
    %vm994 = vcmp.lt.f32.partialorder %v973, 0.0
    %v995 = vsub.f32 0.0, %v993
    %v996 = vsel %vm994, %v995, %v993
    %v997 = vmul.f32 %v968, 0.5
    %v998 = vadd.f32 %v996, 1.0
    %v999 = vmul.f32 %v997, %v998
    %v1000 = vpack.c.bf16 %v999, %v999
    %v1003 = vunpack.c.l.b16 %v125
    %v1004 = vunpack.c.l.b16 %v126
    %v1005 = vpack.c.b16 %v1004, %v1003
    %v1008 = vsel %vm382, %v1000, 0
    %1010 = vmatprep.subr.bf16.mxu0 0
    %1011 = vmatpush1.bf16.msra.mxu0 %v1005
    %1012 = vmatprep.subr.bf16.mxu0 0
    %1013 = vmatpush1.bf16.msra.mxu0 0
    %1014 = vmatprep.subr.bf16.mxu0 0
    %1015 = vmatpush1.bf16.msra.mxu0 0
    %1016 = vmatprep.subr.bf16.mxu0 0
    %1017 = vmatpush1.bf16.msra.mxu0 0
    %1018 = vmatprep.subr.bf16.mxu0 0
    %1019 = vmatpush1.bf16.msra.mxu0 0
    %1020 = vmatprep.subr.bf16.mxu0 0
    %1021 = vmatpush1.bf16.msra.mxu0 0
    %1022 = vmatprep.subr.bf16.mxu0 0
    %1023 = vmatpush1.bf16.msra.mxu0 0
    %1024 = vmatprep.subr.bf16.mxu0 0
    %1025 = vmatpush1.bf16.msra.mxu0 0
    %1026 = vmatprep.subr.bf16.mxu0 0
    %1027 = vmatpush1.bf16.msra.mxu0 0
    %1028 = vmatprep.subr.bf16.mxu0 0
    %1029 = vmatpush1.bf16.msra.mxu0 0
    %1030 = vmatprep.subr.bf16.mxu0 0
    %1031 = vmatpush1.bf16.msra.mxu0 0
    %1032 = vmatprep.subr.bf16.mxu0 0
    %1033 = vmatpush1.bf16.msra.mxu0 0
    %1034 = vmatprep.subr.bf16.mxu0 0
    %1035 = vmatpush1.bf16.msra.mxu0 0
    %1036 = vmatprep.subr.bf16.mxu0 0
    %1037 = vmatpush1.bf16.msra.mxu0 0
    %1038 = vmatprep.subr.bf16.mxu0 0
    %1039 = vmatpush1.bf16.msra.mxu0 0
    %1040 = vmatprep.subr.bf16.mxu0 0
    %1041 = vmatpush1.bf16.msra.mxu0 0
    %1042 = vmatprep.mubr.bf16.mxu0 0
    %1043 = vmatmul.mubr.bf16.gmra.mrb[0].mxu0 %v1008
    %v1044 = vpop.f32.mrb[0].mxu0
    %v1045 = vadd.f32 %v56, %v1044
    %v1046 = vpop.f32.mrb[0].mxu0
    %v1047 = vpop.f32.mrb[0].mxu0
    %v1048 = vpop.f32.mrb[0].mxu0
    %1049 = vdwg.mxu0
    %1050 = vst [vmem:[#allocation7] sm:$0xff] %v1045
    %v1051 = vld [vmem:[%s0 + $0x8] sm:$0xff]
    %v1052 = vlog2.pop %v1051
    %v1053 = vmul.f32 %v1052, 0.6931472
    %v1054 = vmul.f32 %v1053, 0.5
    %v1055 = vand.u32 2147483647, %v1054
    %vm1056 = vcmp.le.f32.partialorder %v1055, 0.7853982
    %vm1057 = vcmp.lt.s32.totalorder %v1054, 0
    %v1058 = vand.u32 %v1054, 2139095040
    %v1059 = vshrl.u32 %v1058, 23
    %v1060 = vsub.s32 %v1059, 127
    %v1061 = vand.u32 2147483647, %v1054
    %v1062 = vand.u32 %v1061, 8388607
    %v1063 = vor.u32 %v1062, 8388608
    %v1064 = vsub.s32 0, %v1063
    %v1065 = vadd.s32 %v1060, 1
    %vm1066 = vcmp.gt.s32.totalorder %v1065, 0
    %v1067 = vsel %vm1066, %v1065, 0
    %v1068 = vshrl.u32 %v1067, 5
    %v1069 = vand.u32 %v1067, 31
    %v1070 = vsub.s32 32, %v1069
    %v1071 = vshrl.u32 683565275, %v1070
    %v1072 = vshll.u32 683565275, %v1069
    %v1073 = vshrl.u32 2475754826, %v1070
    %v1074 = vor.u32 %v1072, %v1073
    %v1075 = vshll.u32 2475754826, %v1069
    %v1076 = vshrl.u32 2131351028, %v1070
    %v1077 = vor.u32 %v1075, %v1076
    %v1078 = vshll.u32 2131351028, %v1069
    %v1079 = vshrl.u32 2102212464, %v1070
    %v1080 = vor.u32 %v1078, %v1079
    %v1081 = vshll.u32 2102212464, %v1069
    %v1082 = vshrl.u32 920167782, %v1070
    %v1083 = vor.u32 %v1081, %v1082
    %v1084 = vshll.u32 920167782, %v1069
    %v1085 = vshrl.u32 1326507024, %v1070
    %v1086 = vor.u32 %v1084, %v1085
    %vm1087 = vcmp.lt.s32.totalorder %v1068, 1
    %vm1088 = vcmp.lt.s32.totalorder %v1068, 2
    %vm1089 = vcmp.lt.s32.totalorder %v1068, 3
    %vm1090 = vcmp.lt.s32.totalorder %v1068, 4
    %v1091 = vsel %vm1087, %v1071, %v1074
    %v1092 = vsel %vm1090, %v1080, 2102212464
    %v1093 = vsel %vm1089, %v1077, %v1092
    %v1094 = vsel %vm1088, %v1091, %v1093
    %v1095 = vsel %vm1087, %v1074, %v1077
    %v1096 = vsel %vm1090, %v1083, 920167782
    %v1097 = vsel %vm1089, %v1080, %v1096
    %v1098 = vsel %vm1088, %v1095, %v1097
    %v1099 = vsel %vm1087, %v1077, %v1080
    %v1100 = vsel %vm1090, %v1086, 1326507024
    %v1101 = vsel %vm1089, %v1083, %v1100
    %v1102 = vsel %vm1088, %v1099, %v1101
    %v1103 = vshll.u32 %v1063, 8
    %v1104 = vmul.u32.u64.compose %v1103, %v1102
    %v1105 = vextract.low.u32 %v1104
    %v1106 = vextract.high.u32 %v1104
    %v1107 = vmul.u32.u64.compose %v1103, %v1098
    %v1108 = vextract.low.u32 %v1107
    %v1109 = vextract.high.u32 %v1107
    %v1110 = vmul.u32 %v1103, %v1094
    %v1111 = vadd.s32 %v1106, %v1108
    %vm1112 = vc.u32 %v1106, %v1108
    %v1113 = vadd.s32 %v1109, 1
    %v1114 = vsel %vm1112, %v1113, %v1109
    %v1115 = vadd.s32 %v1110, %v1114
    %v1116 = vadd.s32 %v1115, 536870912
    %v1117 = vshrl.u32 %v1116, 30
    %v1118 = vshll.u32 %v1117, 30
    %v1119 = vsub.s32 %v1115, %v1118
    %vm1120 = vcmp.lt.s32.totalorder %v1119, 0
    %v1121 = vsub.s32 0, %v1119
    %v1122 = vsel %vm1120, %v1121, %v1119
    %v1123 = vclz %v1122
    %v1124 = vsub.s32 %v1123, 2
    %vm1125 = vcmp.gt.s32.totalorder 0, %v1124
    %v1126 = vsel %vm1125, 0, %v1124
    %v1127 = vsub.s32 32, %v1126
    %v1128 = vshll.u32 %v1119, %v1126
    %v1129 = vshrl.u32 %v1111, %v1127
    %v1130 = vor.u32 %v1128, %v1129
    %v1131 = vsub.s32 4294967266, %v1126
    %v1132 = vadd.s32 %v1131, 127
    %v1133 = vshll.u32 %v1132, 23
    %v1134 = vor.u32 4788187, %v1133
    %v1135 = vand.u32 2147483647, %v1134
    %v1137 = vcvt.s32.f32 %v1130
    %v1138 = vmul.f32 %v1137, %v1135
    %v1139 = vxor.u32 %v1138, 2147483648
    %v1140 = vsel %vm1057, %v1139, %v1138
    %v1141 = vsub.s32 4, %v1117
    %v1142 = vsel %vm1057, %v1141, %v1117
    %v1143 = vsel %vm1056, %v1054, %v1140
    %v1144 = vsel %vm1056, 0, %v1142
    %v1145 = vcosq.f32.pop %v1143
    %v1146 = vsinq.f32.pop %v1143
    %vm1147 = vweird.f32 %v1054
    %v1148 = vadd.s32 %v1144, 3
    %v1149 = vand.u32 %v1148, 3
    %vm1150 = vcmp.lt.s32.totalorder %v1149, 2
    %vm1151 = vcmp.eq.s32.totalorder %v1149, 0
    %v1152 = vxor.u32 %v1146, 2147483648
    %v1153 = vsel %vm1151, %v1145, %v1152
    %vm1154 = vcmp.eq.s32.totalorder %v1149, 2
    %v1155 = vxor.u32 %v1145, 2147483648
    %v1156 = vsel %vm1154, %v1155, %v1146
    %v1157 = vsel %vm1150, %v1153, %v1156
    %v1158 = vsel %vm1147, nan, %v1157
    %v1159 = vand.u32 2147483647, %v1054
    %vm1160 = vcmp.le.f32.partialorder %v1159, 0.7853982
    %vm1161 = vcmp.lt.s32.totalorder %v1054, 0
    %v1162 = vand.u32 %v1054, 2139095040
    %v1163 = vshrl.u32 %v1162, 23
    %v1164 = vsub.s32 %v1163, 127
    %v1165 = vand.u32 2147483647, %v1054
    %v1166 = vand.u32 %v1165, 8388607
    %v1167 = vor.u32 %v1166, 8388608
    %v1168 = vsub.s32 0, %v1167
    %v1169 = vadd.s32 %v1164, 1
    %vm1170 = vcmp.gt.s32.totalorder %v1169, 0
    %v1171 = vsel %vm1170, %v1169, 0
    %v1172 = vshrl.u32 %v1171, 5
    %v1173 = vand.u32 %v1171, 31
    %v1174 = vsub.s32 32, %v1173
    %v1175 = vshrl.u32 683565275, %v1174
    %v1176 = vshll.u32 683565275, %v1173
    %v1177 = vshrl.u32 2475754826, %v1174
    %v1178 = vor.u32 %v1176, %v1177
    %v1179 = vshll.u32 2475754826, %v1173
    %v1180 = vshrl.u32 2131351028, %v1174
    %v1181 = vor.u32 %v1179, %v1180
    %v1182 = vshll.u32 2131351028, %v1173
    %v1183 = vshrl.u32 2102212464, %v1174
    %v1184 = vor.u32 %v1182, %v1183
    %v1185 = vshll.u32 2102212464, %v1173
    %v1186 = vshrl.u32 920167782, %v1174
    %v1187 = vor.u32 %v1185, %v1186
    %v1188 = vshll.u32 920167782, %v1173
    %v1189 = vshrl.u32 1326507024, %v1174
    %v1190 = vor.u32 %v1188, %v1189
    %vm1191 = vcmp.lt.s32.totalorder %v1172, 1
    %vm1192 = vcmp.lt.s32.totalorder %v1172, 2
    %vm1193 = vcmp.lt.s32.totalorder %v1172, 3
    %vm1194 = vcmp.lt.s32.totalorder %v1172, 4
    %v1195 = vsel %vm1191, %v1175, %v1178
    %v1196 = vsel %vm1194, %v1184, 2102212464
    %v1197 = vsel %vm1193, %v1181, %v1196
    %v1198 = vsel %vm1192, %v1195, %v1197
    %v1199 = vsel %vm1191, %v1178, %v1181
    %v1200 = vsel %vm1194, %v1187, 920167782
    %v1201 = vsel %vm1193, %v1184, %v1200
    %v1202 = vsel %vm1192, %v1199, %v1201
    %v1203 = vsel %vm1191, %v1181, %v1184
    %v1204 = vsel %vm1194, %v1190, 1326507024
    %v1205 = vsel %vm1193, %v1187, %v1204
    %v1206 = vsel %vm1192, %v1203, %v1205
    %v1207 = vshll.u32 %v1167, 8
    %v1208 = vmul.u32.u64.compose %v1207, %v1206
    %v1209 = vextract.low.u32 %v1208
    %v1210 = vextract.high.u32 %v1208
    %v1211 = vmul.u32.u64.compose %v1207, %v1202
    %v1212 = vextract.low.u32 %v1211
    %v1213 = vextract.high.u32 %v1211
    %v1214 = vmul.u32 %v1207, %v1198
    %v1215 = vadd.s32 %v1210, %v1212
    %vm1216 = vc.u32 %v1210, %v1212
    %v1217 = vadd.s32 %v1213, 1
    %v1218 = vsel %vm1216, %v1217, %v1213
    %v1219 = vadd.s32 %v1214, %v1218
    %v1220 = vadd.s32 %v1219, 536870912
    %v1221 = vshrl.u32 %v1220, 30
    %v1222 = vshll.u32 %v1221, 30
    %v1223 = vsub.s32 %v1219, %v1222
    %vm1224 = vcmp.lt.s32.totalorder %v1223, 0
    %v1225 = vsub.s32 0, %v1223
    %v1226 = vsel %vm1224, %v1225, %v1223
    %v1227 = vclz %v1226
    %v1228 = vsub.s32 %v1227, 2
    %vm1229 = vcmp.gt.s32.totalorder 0, %v1228
    %v1230 = vsel %vm1229, 0, %v1228
    %v1231 = vsub.s32 32, %v1230
    %v1232 = vshll.u32 %v1223, %v1230
    %v1233 = vshrl.u32 %v1215, %v1231
    %v1234 = vor.u32 %v1232, %v1233
    %v1235 = vsub.s32 4294967266, %v1230
    %v1236 = vadd.s32 %v1235, 127
    %v1237 = vshll.u32 %v1236, 23
    %v1238 = vor.u32 4788187, %v1237
    %v1239 = vand.u32 2147483647, %v1238
    %v1241 = vcvt.s32.f32 %v1234
    %v1242 = vmul.f32 %v1241, %v1239
    %v1243 = vxor.u32 %v1242, 2147483648
    %v1244 = vsel %vm1161, %v1243, %v1242
    %v1245 = vsub.s32 4, %v1221
    %v1246 = vsel %vm1161, %v1245, %v1221
    %v1247 = vsel %vm1160, %v1054, %v1244
    %v1248 = vsel %vm1160, 0, %v1246
    %v1249 = vcosq.f32.pop %v1247
    %v1250 = vsinq.f32.pop %v1247
    %vm1251 = vweird.f32 %v1054
    %v1252 = vand.u32 %v1248, 3
    %vm1253 = vcmp.lt.s32.totalorder %v1252, 2
    %vm1254 = vcmp.eq.s32.totalorder %v1252, 0
    %v1255 = vxor.u32 %v1250, 2147483648
    %v1256 = vsel %vm1254, %v1249, %v1255
    %vm1257 = vcmp.eq.s32.totalorder %v1252, 2
    %v1258 = vxor.u32 %v1249, 2147483648
    %v1259 = vsel %vm1257, %v1258, %v1250
    %v1260 = vsel %vm1253, %v1256, %v1259
    %v1261 = vsel %vm1251, nan, %v1260
    %1263 = vset.pattern.permute.xlu0 3
    %1264 = vperm.xlu0 %1263, %v1051
    %v1265 = vpop.permute.xlu0 %1264
    %v1267 = vmul.f32 %v1265, %v44
    %v1268 = vadd.f32 %v1267, %v49
    %1269 = vset.pattern.permute.xlu0 4
    %1270 = vperm.xlu0 %1269, %v1051
    %v1271 = vpop.permute.xlu0 %1270
    %v1273 = vmul.f32 %v1268, %v1271
    %1274 = vset.pattern.permute.xlu0 0
    %1275 = vperm.xlu0 %1274, %v1051
    %v1276 = vpop.permute.xlu0 %1275
    %v1278 = vmul.f32 %v1276, %v45
    %1279 = vset.pattern.permute.xlu0 1
    %1280 = vperm.xlu0 %1279, %v1051
    %v1281 = vpop.permute.xlu0 %1280
    %v1283 = vmul.f32 %v1281, %v46
    %v1284 = vadd.f32 %v1278, %v1283
    %1286 = vset.pattern.permute.xlu0 2
    %1287 = vperm.xlu0 %1286, %v1158
    %v1288 = vpop.permute.xlu0 %1287
    %v1290 = vmul.f32 %v1288, %v47
    %v1291 = vadd.f32 %v1284, %v1290
    %1293 = vset.pattern.permute.xlu0 2
    %1294 = vperm.xlu0 %1293, %v1261
    %v1295 = vpop.permute.xlu0 %1294
    %v1297 = vmul.f32 %v1295, %v48
    %v1298 = vadd.f32 %v1291, %v1297
    %v1299 = vpack.c.bf16 %v1273, %v1273
    %v1301 = vsel %vm382, %v1299, 0
    %1303 = vmatprep.subr.bf16.mxu0 0
    %1304 = vmatpush1.bf16.msra.mxu0 %v380
    %1305 = vmatprep.subr.bf16.mxu0 0
    %1306 = vmatpush1.bf16.msra.mxu0 0
    %1307 = vmatprep.subr.bf16.mxu0 0
    %1308 = vmatpush1.bf16.msra.mxu0 0
    %1309 = vmatprep.subr.bf16.mxu0 0
    %1310 = vmatpush1.bf16.msra.mxu0 0
    %1311 = vmatprep.subr.bf16.mxu0 0
    %1312 = vmatpush1.bf16.msra.mxu0 0
    %1313 = vmatprep.subr.bf16.mxu0 0
    %1314 = vmatpush1.bf16.msra.mxu0 0
    %1315 = vmatprep.subr.bf16.mxu0 0
    %1316 = vmatpush1.bf16.msra.mxu0 0
    %1317 = vmatprep.subr.bf16.mxu0 0
    %1318 = vmatpush1.bf16.msra.mxu0 0
    %1319 = vmatprep.subr.bf16.mxu0 0
    %1320 = vmatpush1.bf16.msra.mxu0 0
    %1321 = vmatprep.subr.bf16.mxu0 0
    %1322 = vmatpush1.bf16.msra.mxu0 0
    %1323 = vmatprep.subr.bf16.mxu0 0
    %1324 = vmatpush1.bf16.msra.mxu0 0
    %1325 = vmatprep.subr.bf16.mxu0 0
    %1326 = vmatpush1.bf16.msra.mxu0 0
    %1327 = vmatprep.subr.bf16.mxu0 0
    %1328 = vmatpush1.bf16.msra.mxu0 0
    %1329 = vmatprep.subr.bf16.mxu0 0
    %1330 = vmatpush1.bf16.msra.mxu0 0
    %1331 = vmatprep.subr.bf16.mxu0 0
    %1332 = vmatpush1.bf16.msra.mxu0 0
    %1333 = vmatprep.subr.bf16.mxu0 0
    %1334 = vmatpush1.bf16.msra.mxu0 0
    %1335 = vmatprep.mubr.bf16.mxu0 0
    %1336 = vmatmul.mubr.bf16.gmra.mrb[0].mxu0 %v1301
    %v1337 = vpop.f32.mrb[0].mxu0
    %v1338 = vadd.f32 0.0, %v1337
    %v1339 = vpop.f32.mrb[0].mxu0
    %v1340 = vpop.f32.mrb[0].mxu0
    %v1341 = vpop.f32.mrb[0].mxu0
    %1342 = vdwg.mxu0
    %v1343 = vadd.f32 %v1298, %v1338
    %v1344 = vadd.f32 %v1343, %v50
    %v1345 = vmul.f32 %v1344, 0.70710677
    %v1346 = vand.u32 2147483647, %v1345
    %v1347 = vmul.f32 %v1346, 0.3275911
    %v1348 = vadd.f32 %v1347, 1.0
    %v1349 = vrcp.pop %v1348
    %v1350 = vmul.f32 1.0, %v1349
    %v1351 = vmul.f32 %v1350, 1.0614054
    %v1352 = vadd.f32 %v1351, -1.4531521
    %v1353 = vmul.f32 %v1350, %v1352
    %v1354 = vadd.f32 %v1353, 1.4214138
    %v1355 = vmul.f32 %v1350, %v1354
    %v1356 = vadd.f32 %v1355, -0.28449672
    %v1357 = vmul.f32 %v1350, %v1356
    %v1358 = vadd.f32 %v1357, 0.2548296
    %v1359 = vmul.f32 %v1350, %v1358
    %v1360 = vmul.f32 %v1346, %v1346
    %v1361 = vsub.f32 0.0, %v1360
    %v1362 = vmul.f32 %v1361, 1.442695
    %v1363 = vpow.pop %v1362
    %v1364 = vmul.f32 %v1359, %v1363
    %v1365 = vsub.f32 1.0, %v1364
    %vm1366 = vcmp.lt.f32.partialorder %v1345, 0.0
    %v1367 = vsub.f32 0.0, %v1365
    %v1368 = vsel %vm1366, %v1367, %v1365
    %v1369 = vmul.f32 %v1344, 0.5
    %v1370 = vadd.f32 %v1368, 1.0
    %v1371 = vmul.f32 %v1369, %v1370
    %v1372 = vpack.c.bf16 %v1371, %v1371
    %v1374 = vsel %vm382, %v1372, 0
    %1376 = vmatprep.subr.bf16.mxu0 0
    %1377 = vmatpush1.bf16.msra.mxu0 %v460
    %1378 = vmatprep.subr.bf16.mxu0 0
    %1379 = vmatpush1.bf16.msra.mxu0 0
    %1380 = vmatprep.subr.bf16.mxu0 0
    %1381 = vmatpush1.bf16.msra.mxu0 0
    %1382 = vmatprep.subr.bf16.mxu0 0
    %1383 = vmatpush1.bf16.msra.mxu0 0
    %1384 = vmatprep.subr.bf16.mxu0 0
    %1385 = vmatpush1.bf16.msra.mxu0 0
    %1386 = vmatprep.subr.bf16.mxu0 0
    %1387 = vmatpush1.bf16.msra.mxu0 0
    %1388 = vmatprep.subr.bf16.mxu0 0
    %1389 = vmatpush1.bf16.msra.mxu0 0
    %1390 = vmatprep.subr.bf16.mxu0 0
    %1391 = vmatpush1.bf16.msra.mxu0 0
    %1392 = vmatprep.subr.bf16.mxu0 0
    %1393 = vmatpush1.bf16.msra.mxu0 0
    %1394 = vmatprep.subr.bf16.mxu0 0
    %1395 = vmatpush1.bf16.msra.mxu0 0
    %1396 = vmatprep.subr.bf16.mxu0 0
    %1397 = vmatpush1.bf16.msra.mxu0 0
    %1398 = vmatprep.subr.bf16.mxu0 0
    %1399 = vmatpush1.bf16.msra.mxu0 0
    %1400 = vmatprep.subr.bf16.mxu0 0
    %1401 = vmatpush1.bf16.msra.mxu0 0
    %1402 = vmatprep.subr.bf16.mxu0 0
    %1403 = vmatpush1.bf16.msra.mxu0 0
    %1404 = vmatprep.subr.bf16.mxu0 0
    %1405 = vmatpush1.bf16.msra.mxu0 0
    %1406 = vmatprep.subr.bf16.mxu0 0
    %1407 = vmatpush1.bf16.msra.mxu0 0
    %1408 = vmatprep.mubr.bf16.mxu0 0
    %1409 = vmatmul.mubr.bf16.gmra.mrb[0].mxu0 %v1374
    %v1410 = vpop.f32.mrb[0].mxu0
    %v1411 = vadd.f32 %v51, %v1410
    %v1412 = vpop.f32.mrb[0].mxu0
    %v1413 = vpop.f32.mrb[0].mxu0
    %v1414 = vpop.f32.mrb[0].mxu0
    %1415 = vdwg.mxu0
    %v1416 = vmul.f32 %v1411, 0.70710677
    %v1417 = vand.u32 2147483647, %v1416
    %v1418 = vmul.f32 %v1417, 0.3275911
    %v1419 = vadd.f32 %v1418, 1.0
    %v1420 = vrcp.pop %v1419
    %v1421 = vmul.f32 1.0, %v1420
    %v1422 = vmul.f32 %v1421, 1.0614054
    %v1423 = vadd.f32 %v1422, -1.4531521
    %v1424 = vmul.f32 %v1421, %v1423
    %v1425 = vadd.f32 %v1424, 1.4214138
    %v1426 = vmul.f32 %v1421, %v1425
    %v1427 = vadd.f32 %v1426, -0.28449672
    %v1428 = vmul.f32 %v1421, %v1427
    %v1429 = vadd.f32 %v1428, 0.2548296
    %v1430 = vmul.f32 %v1421, %v1429
    %v1431 = vmul.f32 %v1417, %v1417
    %v1432 = vsub.f32 0.0, %v1431
    %v1433 = vmul.f32 %v1432, 1.442695
    %v1434 = vpow.pop %v1433
    %v1435 = vmul.f32 %v1430, %v1434
    %v1436 = vsub.f32 1.0, %v1435
    %vm1437 = vcmp.lt.f32.partialorder %v1416, 0.0
    %v1438 = vsub.f32 0.0, %v1436
    %v1439 = vsel %vm1437, %v1438, %v1436
    %v1440 = vmul.f32 %v1411, 0.5
    %v1441 = vadd.f32 %v1439, 1.0
    %v1442 = vmul.f32 %v1440, %v1441
    %v1443 = vpack.c.bf16 %v1442, %v1442
    %1444 = vmatprep.subr.bf16.mxu0 %v593
    %1445 = vmatpush1.bf16.msra.mxu0 %v592
    %1446 = vmatprep.subr.bf16.mxu0 %v595
    %1447 = vmatpush1.bf16.msra.mxu0 %v594
    %1448 = vmatprep.subr.bf16.mxu0 %v597
    %1449 = vmatpush1.bf16.msra.mxu0 %v596
    %1450 = vmatprep.subr.bf16.mxu0 %v599
    %1451 = vmatpush1.bf16.msra.mxu0 %v598
    %1452 = vmatprep.subr.bf16.mxu0 %v601
    %1453 = vmatpush1.bf16.msra.mxu0 %v600
    %1454 = vmatprep.subr.bf16.mxu0 %v603
    %1455 = vmatpush1.bf16.msra.mxu0 %v602
    %1456 = vmatprep.subr.bf16.mxu0 %v605
    %1457 = vmatpush1.bf16.msra.mxu0 %v604
    %1458 = vmatprep.subr.bf16.mxu0 %v607
    %1459 = vmatpush1.bf16.msra.mxu0 %v606
    %1460 = vmatprep.subr.bf16.mxu0 0
    %1461 = vmatpush1.bf16.msra.mxu0 0
    %1462 = vmatprep.subr.bf16.mxu0 0
    %1463 = vmatpush1.bf16.msra.mxu0 0
    %1464 = vmatprep.subr.bf16.mxu0 0
    %1465 = vmatpush1.bf16.msra.mxu0 0
    %1466 = vmatprep.subr.bf16.mxu0 0
    %1467 = vmatpush1.bf16.msra.mxu0 0
    %1468 = vmatprep.subr.bf16.mxu0 0
    %1469 = vmatpush1.bf16.msra.mxu0 0
    %1470 = vmatprep.subr.bf16.mxu0 0
    %1471 = vmatpush1.bf16.msra.mxu0 0
    %1472 = vmatprep.subr.bf16.mxu0 0
    %1473 = vmatpush1.bf16.msra.mxu0 0
    %1474 = vmatprep.subr.bf16.mxu0 0
    %1475 = vmatpush1.bf16.msra.mxu0 0
    %1476 = vmatprep.mubr.bf16.mxu0 0
    %1477 = vmatmul.mubr.bf16.gmra.mrb[0].mxu0 %v1443
    %v1478 = vpop.f32.mrb[0].mxu0
    %v1479 = vadd.f32 %v537, %v1478
    %v1480 = vpop.f32.mrb[0].mxu0
    %v1481 = vadd.f32 %v541, %v1480
    %v1482 = vpop.f32.mrb[0].mxu0
    %v1483 = vpop.f32.mrb[0].mxu0
    %1484 = vdwg.mxu0
    %v1485 = vmul.f32 %v1479, 0.70710677
    %v1486 = vmul.f32 %v1481, 0.70710677
    %v1487 = vand.u32 2147483647, %v1485
    %v1488 = vand.u32 2147483647, %v1486
    %v1489 = vmul.f32 %v1487, 0.3275911
    %v1490 = vmul.f32 %v1488, 0.3275911
    %v1491 = vadd.f32 %v1489, 1.0
    %v1492 = vadd.f32 %v1490, 1.0
    %v1493 = vrcp.pop %v1491
    %v1494 = vmul.f32 1.0, %v1493
    %v1495 = vrcp.pop %v1492
    %v1496 = vmul.f32 1.0, %v1495
    %v1497 = vmul.f32 %v1494, 1.0614054
    %v1498 = vmul.f32 %v1496, 1.0614054
    %v1499 = vadd.f32 %v1497, -1.4531521
    %v1500 = vadd.f32 %v1498, -1.4531521
    %v1501 = vmul.f32 %v1494, %v1499
    %v1502 = vmul.f32 %v1496, %v1500
    %v1503 = vadd.f32 %v1501, 1.4214138
    %v1504 = vadd.f32 %v1502, 1.4214138
    %v1505 = vmul.f32 %v1494, %v1503
    %v1506 = vmul.f32 %v1496, %v1504
    %v1507 = vadd.f32 %v1505, -0.28449672
    %v1508 = vadd.f32 %v1506, -0.28449672
    %v1509 = vmul.f32 %v1494, %v1507
    %v1510 = vmul.f32 %v1496, %v1508
    %v1511 = vadd.f32 %v1509, 0.2548296
    %v1512 = vadd.f32 %v1510, 0.2548296
    %v1513 = vmul.f32 %v1494, %v1511
    %v1514 = vmul.f32 %v1496, %v1512
    %v1515 = vmul.f32 %v1487, %v1487
    %v1516 = vmul.f32 %v1488, %v1488
    %v1517 = vsub.f32 0.0, %v1515
    %v1518 = vsub.f32 0.0, %v1516
    %v1519 = vmul.f32 %v1517, 1.442695
    %v1520 = vpow.pop %v1519
    %v1521 = vmul.f32 %v1518, 1.442695
    %v1522 = vpow.pop %v1521
    %v1523 = vmul.f32 %v1513, %v1520
    %v1524 = vmul.f32 %v1514, %v1522
    %v1525 = vsub.f32 1.0, %v1523
    %v1526 = vsub.f32 1.0, %v1524
    %vm1527 = vcmp.lt.f32.partialorder %v1485, 0.0
    %vm1528 = vcmp.lt.f32.partialorder %v1486, 0.0
    %v1529 = vsub.f32 0.0, %v1525
    %v1530 = vsub.f32 0.0, %v1526
    %v1531 = vsel %vm1527, %v1529, %v1525
    %v1532 = vsel %vm1528, %v1530, %v1526
    %v1533 = vmul.f32 %v1479, 0.5
    %v1534 = vmul.f32 %v1481, 0.5
    %v1535 = vadd.f32 %v1531, 1.0
    %v1536 = vadd.f32 %v1532, 1.0
    %v1537 = vmul.f32 %v1533, %v1535
    %v1538 = vmul.f32 %v1534, %v1536
    %v1539 = vpack.c.bf16 %v1537, %v1537
    %v1540 = vpack.c.bf16 %v1538, %v1538
    %1541 = vmatprep.subr.bf16.mxu0 0
    %1542 = vmatpush1.bf16.msra.mxu0 %v785
    %1543 = vmatprep.subr.bf16.mxu0 0
    %1544 = vmatpush1.bf16.msra.mxu0 %v786
    %1545 = vmatprep.subr.bf16.mxu0 0
    %1546 = vmatpush1.bf16.msra.mxu0 %v787
    %1547 = vmatprep.subr.bf16.mxu0 0
    %1548 = vmatpush1.bf16.msra.mxu0 %v788
    %1549 = vmatprep.subr.bf16.mxu0 0
    %1550 = vmatpush1.bf16.msra.mxu0 %v789
    %1551 = vmatprep.subr.bf16.mxu0 0
    %1552 = vmatpush1.bf16.msra.mxu0 %v790
    %1553 = vmatprep.subr.bf16.mxu0 0
    %1554 = vmatpush1.bf16.msra.mxu0 %v791
    %1555 = vmatprep.subr.bf16.mxu0 0
    %1556 = vmatpush1.bf16.msra.mxu0 %v792
    %1557 = vmatprep.subr.bf16.mxu0 0
    %1558 = vmatpush1.bf16.msra.mxu0 %v793
    %1559 = vmatprep.subr.bf16.mxu0 0
    %1560 = vmatpush1.bf16.msra.mxu0 %v794
    %1561 = vmatprep.subr.bf16.mxu0 0
    %1562 = vmatpush1.bf16.msra.mxu0 %v795
    %1563 = vmatprep.subr.bf16.mxu0 0
    %1564 = vmatpush1.bf16.msra.mxu0 %v796
    %1565 = vmatprep.subr.bf16.mxu0 0
    %1566 = vmatpush1.bf16.msra.mxu0 %v797
    %1567 = vmatprep.subr.bf16.mxu0 0
    %1568 = vmatpush1.bf16.msra.mxu0 %v798
    %1569 = vmatprep.subr.bf16.mxu0 0
    %1570 = vmatpush1.bf16.msra.mxu0 %v799
    %1571 = vmatprep.subr.bf16.mxu0 0
    %1572 = vmatpush1.bf16.msra.mxu0 %v800
    %1573 = vmatprep.mubr.bf16.mxu0 %v1540
    %1574 = vmatmul.mubr.bf16.gmra.mrb[0].mxu0 %v1539
    %v1575 = vpop.f32.mrb[0].mxu0
    %v1576 = vadd.f32 %v54, %v1575
    %v1577 = vpop.f32.mrb[0].mxu0
    %v1578 = vpop.f32.mrb[0].mxu0
    %v1579 = vpop.f32.mrb[0].mxu0
    %1580 = vdwg.mxu0
    %v1581 = vmul.f32 %v1576, 0.70710677
    %v1582 = vand.u32 2147483647, %v1581
    %v1583 = vmul.f32 %v1582, 0.3275911
    %v1584 = vadd.f32 %v1583, 1.0
    %v1585 = vrcp.pop %v1584
    %v1586 = vmul.f32 1.0, %v1585
    %v1587 = vmul.f32 %v1586, 1.0614054
    %v1588 = vadd.f32 %v1587, -1.4531521
    %v1589 = vmul.f32 %v1586, %v1588
    %v1590 = vadd.f32 %v1589, 1.4214138
    %v1591 = vmul.f32 %v1586, %v1590
    %v1592 = vadd.f32 %v1591, -0.28449672
    %v1593 = vmul.f32 %v1586, %v1592
    %v1594 = vadd.f32 %v1593, 0.2548296
    %v1595 = vmul.f32 %v1586, %v1594
    %v1596 = vmul.f32 %v1582, %v1582
    %v1597 = vsub.f32 0.0, %v1596
    %v1598 = vmul.f32 %v1597, 1.442695
    %v1599 = vpow.pop %v1598
    %v1600 = vmul.f32 %v1595, %v1599
    %v1601 = vsub.f32 1.0, %v1600
    %vm1602 = vcmp.lt.f32.partialorder %v1581, 0.0
    %v1603 = vsub.f32 0.0, %v1601
    %v1604 = vsel %vm1602, %v1603, %v1601
    %v1605 = vmul.f32 %v1576, 0.5
    %v1606 = vadd.f32 %v1604, 1.0
    %v1607 = vmul.f32 %v1605, %v1606
    %v1608 = vpack.c.bf16 %v1607, %v1607
    %1609 = vmatprep.subr.bf16.mxu0 0
    %1610 = vmatpush1.bf16.msra.mxu0 %v917
    %1611 = vmatprep.subr.bf16.mxu0 0
    %1612 = vmatpush1.bf16.msra.mxu0 %v918
    %1613 = vmatprep.subr.bf16.mxu0 0
    %1614 = vmatpush1.bf16.msra.mxu0 %v919
    %1615 = vmatprep.subr.bf16.mxu0 0
    %1616 = vmatpush1.bf16.msra.mxu0 %v920
    %1617 = vmatprep.subr.bf16.mxu0 0
    %1618 = vmatpush1.bf16.msra.mxu0 %v921
    %1619 = vmatprep.subr.bf16.mxu0 0
    %1620 = vmatpush1.bf16.msra.mxu0 %v922
    %1621 = vmatprep.subr.bf16.mxu0 0
    %1622 = vmatpush1.bf16.msra.mxu0 %v923
    %1623 = vmatprep.subr.bf16.mxu0 0
    %1624 = vmatpush1.bf16.msra.mxu0 %v924
    %1625 = vmatprep.subr.bf16.mxu0 0
    %1626 = vmatpush1.bf16.msra.mxu0 0
    %1627 = vmatprep.subr.bf16.mxu0 0
    %1628 = vmatpush1.bf16.msra.mxu0 0
    %1629 = vmatprep.subr.bf16.mxu0 0
    %1630 = vmatpush1.bf16.msra.mxu0 0
    %1631 = vmatprep.subr.bf16.mxu0 0
    %1632 = vmatpush1.bf16.msra.mxu0 0
    %1633 = vmatprep.subr.bf16.mxu0 0
    %1634 = vmatpush1.bf16.msra.mxu0 0
    %1635 = vmatprep.subr.bf16.mxu0 0
    %1636 = vmatpush1.bf16.msra.mxu0 0
    %1637 = vmatprep.subr.bf16.mxu0 0
    %1638 = vmatpush1.bf16.msra.mxu0 0
    %1639 = vmatprep.subr.bf16.mxu0 0
    %1640 = vmatpush1.bf16.msra.mxu0 0
    %1641 = vmatprep.mubr.bf16.mxu0 0
    %1642 = vmatmul.mubr.bf16.gmra.mrb[0].mxu0 %v1608
    %v1643 = vpop.f32.mrb[0].mxu0
    %v1644 = vadd.f32 %v55, %v1643
    %v1645 = vpop.f32.mrb[0].mxu0
    %v1646 = vpop.f32.mrb[0].mxu0
    %v1647 = vpop.f32.mrb[0].mxu0
    %1648 = vdwg.mxu0
    %v1649 = vmul.f32 %v1644, 0.70710677
    %v1650 = vand.u32 2147483647, %v1649
    %v1651 = vmul.f32 %v1650, 0.3275911
    %v1652 = vadd.f32 %v1651, 1.0
    %v1653 = vrcp.pop %v1652
    %v1654 = vmul.f32 1.0, %v1653
    %v1655 = vmul.f32 %v1654, 1.0614054
    %v1656 = vadd.f32 %v1655, -1.4531521
    %v1657 = vmul.f32 %v1654, %v1656
    %v1658 = vadd.f32 %v1657, 1.4214138
    %v1659 = vmul.f32 %v1654, %v1658
    %v1660 = vadd.f32 %v1659, -0.28449672
    %v1661 = vmul.f32 %v1654, %v1660
    %v1662 = vadd.f32 %v1661, 0.2548296
    %v1663 = vmul.f32 %v1654, %v1662
    %v1664 = vmul.f32 %v1650, %v1650
    %v1665 = vsub.f32 0.0, %v1664
    %v1666 = vmul.f32 %v1665, 1.442695
    %v1667 = vpow.pop %v1666
    %v1668 = vmul.f32 %v1663, %v1667
    %v1669 = vsub.f32 1.0, %v1668
    %vm1670 = vcmp.lt.f32.partialorder %v1649, 0.0
    %v1671 = vsub.f32 0.0, %v1669
    %v1672 = vsel %vm1670, %v1671, %v1669
    %v1673 = vmul.f32 %v1644, 0.5
    %v1674 = vadd.f32 %v1672, 1.0
    %v1675 = vmul.f32 %v1673, %v1674
    %v1676 = vpack.c.bf16 %v1675, %v1675
    %v1678 = vsel %vm382, %v1676, 0
    %1680 = vmatprep.subr.bf16.mxu0 0
    %1681 = vmatpush1.bf16.msra.mxu0 %v1005
    %1682 = vmatprep.subr.bf16.mxu0 0
    %1683 = vmatpush1.bf16.msra.mxu0 0
    %1684 = vmatprep.subr.bf16.mxu0 0
    %1685 = vmatpush1.bf16.msra.mxu0 0
    %1686 = vmatprep.subr.bf16.mxu0 0
    %1687 = vmatpush1.bf16.msra.mxu0 0
    %1688 = vmatprep.subr.bf16.mxu0 0
    %1689 = vmatpush1.bf16.msra.mxu0 0
    %1690 = vmatprep.subr.bf16.mxu0 0
    %1691 = vmatpush1.bf16.msra.mxu0 0
    %1692 = vmatprep.subr.bf16.mxu0 0
    %1693 = vmatpush1.bf16.msra.mxu0 0
    %1694 = vmatprep.subr.bf16.mxu0 0
    %1695 = vmatpush1.bf16.msra.mxu0 0
    %1696 = vmatprep.subr.bf16.mxu0 0
    %1697 = vmatpush1.bf16.msra.mxu0 0
    %1698 = vmatprep.subr.bf16.mxu0 0
    %1699 = vmatpush1.bf16.msra.mxu0 0
    %1700 = vmatprep.subr.bf16.mxu0 0
    %1701 = vmatpush1.bf16.msra.mxu0 0
    %1702 = vmatprep.subr.bf16.mxu0 0
    %1703 = vmatpush1.bf16.msra.mxu0 0
    %1704 = vmatprep.subr.bf16.mxu0 0
    %1705 = vmatpush1.bf16.msra.mxu0 0
    %1706 = vmatprep.subr.bf16.mxu0 0
    %1707 = vmatpush1.bf16.msra.mxu0 0
    %1708 = vmatprep.subr.bf16.mxu0 0
    %1709 = vmatpush1.bf16.msra.mxu0 0
    %1710 = vmatprep.subr.bf16.mxu0 0
    %1711 = vmatpush1.bf16.msra.mxu0 0
    %1712 = vmatprep.mubr.bf16.mxu0 0
    %1713 = vmatmul.mubr.bf16.gmra.mrb[0].mxu0 %v1678
    %v1714 = vpop.f32.mrb[0].mxu0
    %v1715 = vadd.f32 %v56, %v1714
    %v1716 = vpop.f32.mrb[0].mxu0
    %v1717 = vpop.f32.mrb[0].mxu0
    %v1718 = vpop.f32.mrb[0].mxu0
    %1719 = vdwg.mxu0
    %1720 = vst [vmem:[#allocation7 + $0x8] sm:$0xff] %v1715
    // Predicated region
    $region22: #{tpu_custom_call.1} parent=1 // pred_check
      _
    $region23: #{tpu_custom_call.1} parent=1 // pred_check_branch
      %1722 = sbr.rel (0) target = $region25
    $region24: #{tpu_custom_call.1} parent=1 // pred_region
      %s1724 = ssub.s32 256, 256
      %1725 = vsyncadd [#allocation4], %s1724
      %s1726 = sshll.u32 [#allocation7], 4
      %s1727 = int_to_ptr.vmem [resolvable:$true] %s1726
      %1732 = dma.vmem_to_hbm [thread:$0]  %s1727, 256, %s3, [#allocation4], 128, 128, 8
    $region25: #{tpu_custom_call.1} parent=1 // pred_fallthru
      _
    // Predicated region
    $region26: #{tpu_custom_call.1} parent=1 // pred_check
      _
    $region27: #{tpu_custom_call.1} parent=1 // pred_check_branch
      %1734 = sbr.rel (0) target = $region29
    $region28: #{tpu_custom_call.1} parent=1 // pred_region
      %1735 = dma.done [#allocation4], 256
    $region29: #{tpu_custom_call.1} parent=1 // pred_fallthru
      _
    %1736 = vsyncpa [#allocation3], 1
    %1737 = vsyncpa [#allocation6], 1
    %1738 = vsyncpa [#allocation4], 1

</llo_original>
